<compile_context>
chip_gen: v5e
topology: v5e:2x2
jax: 0.10.0
libtpu: 0.0.40
codegen_flags: <defaults>
</compile_context>

<pallas_src>
import jax
import jax.numpy as jnp
from jax.experimental import pallas as pl
from jax.experimental.pallas import tpu as pltpu


def _round_up(x, m):
    return ((x + m - 1) // m) * m


def _pick_batch_group(N, img_stride, max_lanes=8192):
    """Largest divisor of N keeping the im2col scratch lane width <= max_lanes."""
    nb = 1
    for cand in range(1, N + 1):
        if N % cand == 0 and cand * img_stride <= max_lanes:
            nb = cand
    return nb


def _make_kernel(NB, Cin, Cmid, Cout, Wp, HWp, img_stride, H, W):
    """Kernel closure over static geometry.

    NB         : images per grid step
    Cin, Cmid, Cout : channel counts
    Wp         : padded width (W + 2)
    HWp        : flat conv-output columns per image = H * Wp (incl. 2 junk cols / row)
    img_stride : lane-aligned per-image column stride in the im2col scratch
    """
    K1 = 9 * Cin + 1            # fused contraction length (9 taps * Cin + bias row)
    NBW = NB * img_stride       # total scratch lane width (multiple of 128)

    def kernel(x_ref, w1_ref, w2_ref, out_ref, xcol_ref, hcol_ref):
        # x_ref   : (NB, Cin, Pf)   bf16  zero-padded, flattened NCHW activations
        # w1_ref  : (Cmid, K1)      bf16  3x3 conv weights, tap-major, bias folded
        # w2_ref  : (Cout, Cmid+1)  bf16  1x1 conv weights, bias folded
        # out_ref : (NB, Cout, H*W) bf16  packed lane-dense NCHW output
        # xcol_ref: (K1, NBW)       bf16  VMEM im2col operand (scratch)
        # hcol_ref: (Cmid+1, NBW)   bf16  VMEM hidden activations + ones row (scratch)

        ones_row = jnp.ones((1, NBW), jnp.bfloat16)
        xcol_ref[K1 - 1:K1, :] = ones_row            # bias row for conv1
        hcol_ref[Cmid:Cmid + 1, :] = ones_row        # bias row for conv2

        # Stack the 9 shifted band slices of every image along the contraction axis.
        for b in range(NB):
            col0 = b * img_stride
            for t in range(9):
                dy, dx = divmod(t, 3)
                o = dy * Wp + dx                      # static tap offset in flat pixels
                xcol_ref[t * Cin:(t + 1) * Cin, col0:col0 + HWp] = x_ref[b, :, o:o + HWp]

        # conv1 (3x3, pad 1) + bias + ReLU : ONE fused MXU matmul, f32 accumulation.
        h = jnp.dot(w1_ref[...], xcol_ref[...], preferred_element_type=jnp.float32)
        hcol_ref[0:Cmid, :] = jnp.maximum(h, 0.0).astype(jnp.bfloat16)

        # conv2 (1x1) + bias + ReLU.
        y = jnp.dot(w2_ref[...], hcol_ref[...], preferred_element_type=jnp.float32)
        y = jnp.maximum(y, 0.0).astype(jnp.bfloat16)

        # In-kernel compaction: drop the 2 pad columns per row and store the packed
        # (Cout, H*W) NCHW layout directly (lane-dense, no wrapper crop).
        for b in range(NB):
            col0 = b * img_stride
            for r in range(H):
                src = col0 + r * Wp
                out_ref[b, :, r * W:(r + 1) * W] = y[:, src:src + W]

    return kernel


def unet_up_block(x, feat, w1, b1, w2, b2):
    """x: (N, Cx, h, w), feat: (N, Cf, 2h, 2w) NCHW (PyTorch convention).
    w1: (Cmid, Cin, 3, 3), b1: (Cmid,), w2: (Cout, Cmid, 1, 1), b2: (Cout,),
    with Cin = Cx + Cf. Returns (N, Cout, 2h, 2w) in bf16."""
    N, Cx, h_in, w_in = x.shape
    Cf = feat.shape[1]
    H, W = 2 * h_in, 2 * w_in
    Cmid, Cin = w1.shape[0], w1.shape[1]
    Cout = w2.shape[0]
    assert Cin == Cx + Cf and feat.shape == (N, Cf, H, W)

    Hp, Wp = H + 2, W + 2
    HWp = H * Wp                                   # flat conv-output cols per image
    HW = H * W
    Pf = _round_up(Hp * Wp + 2, 128)               # +2 tail keeps last tap slice in bounds
    img_stride = _round_up(HWp, 128)               # lane-aligned per-image scratch stride

    # --- thin bf16 XLA prologue: nearest-2x upsample + concat + zero-pad (NCHW) ---
    # TODO(synk): fold this into the kernel to remove the remaining HBM round trip.
    x16 = x.astype(jnp.bfloat16)
    f16 = feat.astype(jnp.bfloat16)
    xu = jnp.repeat(jnp.repeat(x16, 2, axis=2), 2, axis=3)            # (N, Cx, H, W)
    xc = jnp.concatenate([xu, f16], axis=1)                           # (N, Cin, H, W)
    xpad = jnp.pad(xc, ((0, 0), (0, 0), (1, 1), (1, 1)))              # (N, Cin, Hp, Wp)
    xflat = jnp.pad(xpad.reshape(N, Cin, Hp * Wp),
                    ((0, 0), (0, 0), (0, Pf - Hp * Wp)))              # (N, Cin, Pf) bf16

    # conv1 (O,I,3,3) -> tap-major (Cmid, 9*Cin), bias folded as an extra column.
    w1f = jnp.transpose(w1, (0, 2, 3, 1)).reshape(Cmid, 9 * Cin)
    w1_aug = jnp.concatenate([w1f, b1.reshape(Cmid, 1)], axis=1).astype(jnp.bfloat16)
    # conv2 (O,I,1,1) -> (Cout, Cmid), bias folded as an extra column.
    w2_aug = jnp.concatenate([w2.reshape(Cout, Cmid), b2.reshape(Cout, 1)],
                             axis=1).astype(jnp.bfloat16)

    NB = _pick_batch_group(N, img_stride)
    kernel = _make_kernel(NB, Cin, Cmid, Cout, Wp, HWp, img_stride, H, W)

    out_flat = pl.pallas_call(
        kernel,
        out_shape=jax.ShapeDtypeStruct((N, Cout, HW), jnp.bfloat16),
        grid_spec=pltpu.PrefetchScalarGridSpec(
            num_scalar_prefetch=0,
            grid=(N // NB,),
            in_specs=[
                pl.BlockSpec((NB, Cin, Pf), lambda g: (g, 0, 0)),          # activations
                pl.BlockSpec((Cmid, 9 * Cin + 1), lambda g: (0, 0)),       # conv1 W (resident)
                pl.BlockSpec((Cout, Cmid + 1), lambda g: (0, 0)),          # conv2 W (resident)
            ],
            out_specs=pl.BlockSpec((NB, Cout, HW), lambda g: (g, 0, 0)),   # packed NCHW
            scratch_shapes=[
                pltpu.VMEM((9 * Cin + 1, NB * img_stride), jnp.bfloat16),  # im2col operand
                pltpu.VMEM((Cmid + 1, NB * img_stride), jnp.bfloat16),     # hidden + ones row
            ],
        ),
        compiler_params=pltpu.CompilerParams(
            dimension_semantics=("parallel",),
            vmem_limit_bytes=32 * 1024 * 1024,
        ),
    )(xflat, w1_aug, w2_aug)

    # Output is already packed NCHW; this reshape is contiguous (free).
    return out_flat.reshape(N, Cout, H, W)


def _reference(x, feat, w1, b1, w2, b2):
    """Pure-JAX f32 reference mirroring the PyTorch forward (NCHW)."""
    xu = jnp.repeat(jnp.repeat(x, 2, axis=2), 2, axis=3)
    xc = jnp.concatenate([xu, feat], axis=1)
    dn1 = jax.lax.conv_dimension_numbers(xc.shape, w1.shape, ("NCHW", "OIHW", "NCHW"))
    h = jax.lax.conv_general_dilated(xc, w1, (1, 1), ((1, 1), (1, 1)), dimension_numbers=dn1)
    h = jax.nn.relu(h + b1[None, :, None, None])
    dn2 = jax.lax.conv_dimension_numbers(h.shape, w2.shape, ("NCHW", "OIHW", "NCHW"))
    y = jax.lax.conv_general_dilated(h, w2, (1, 1), ((0, 0), (0, 0)), dimension_numbers=dn2)
    return jax.nn.relu(y + b2[None, :, None, None])


if __name__ == "__main__":
    # Module config: in_feats = Cx + Cf = 8, out_feats = 4
    N, Cx, h_sp, w_sp = 2, 4, 8, 8          # low-res input x
    Cf = 4                                  # skip-connection feature channels
    in_feats = Cx + Cf                      # 8
    out_feats = 4
    Cmid = out_feats * 2                    # conv1 out channels = 8
    H, W = 2 * h_sp, 2 * w_sp               # 16 x 16 after upsampling

    key = jax.random.PRNGKey(0)
    kx, kf, kw1, kb1, kw2, kb2 = jax.random.split(key, 6)
    x = jax.random.normal(kx, (N, Cx, h_sp, w_sp), dtype=jnp.float32)
    feat = jax.random.normal(kf, (N, Cf, H, W), dtype=jnp.float32)
    w1 = 0.1 * jax.random.normal(kw1, (Cmid, in_feats, 3, 3), dtype=jnp.float32)
    b1 = 0.1 * jax.random.normal(kb1, (Cmid,), dtype=jnp.float32)
    w2 = 0.1 * jax.random.normal(kw2, (out_feats, Cmid, 1, 1), dtype=jnp.float32)
    b2 = 0.1 * jax.random.normal(kb2, (out_feats,), dtype=jnp.float32)

    out = jax.jit(unet_up_block)(x, feat, w1, b1, w2, b2)
    out = jax.block_until_ready(out)

    ref = _reference(x, feat, w1, b1, w2, b2)
    assert out.shape == (N, out_feats, H, W), out.shape
    # bf16 operands + bf16 output (f32 accumulation) vs. pure-f32 reference.
    out_f32 = out.astype(jnp.float32)
    max_err = float(jnp.max(jnp.abs(out_f32 - ref)))
    assert jnp.allclose(out_f32, ref, atol=3e-2, rtol=3e-2), max_err

    print("KERNEL_OK")
</pallas_src>

<mosaic_0001>
module attributes {stable_mosaic.version = 11 : i64} {
  func.func @kernel(%arg0: i32, %arg1: memref<2x8x384xbf16, #tpu.memory_space<vmem>>, %arg2: memref<8x73xbf16, #tpu.memory_space<vmem>>, %arg3: memref<4x9xbf16, #tpu.memory_space<vmem>>, %arg4: memref<2x4x256xbf16, #tpu.memory_space<vmem>>, %arg5: memref<73x768xbf16, #tpu.memory_space<vmem>>, %arg6: memref<9x768xbf16, #tpu.memory_space<vmem>>) attributes {dimension_semantics = [#tpu.dimension_semantics<parallel>], iteration_bounds = array<i64: 1>, scalar_prefetch = 0 : i64, scratch_operands = 2 : i64, tpu.core_type = #tpu.core_type<tc>, window_params = [{transform_indices = @transform_0, window_bounds = array<i64: 2, 8, 384>}, {pipeline_mode = #tpu.pipeline_mode<synchronous>, transform_indices = @transform_1, window_bounds = array<i64: 8, 73>}, {pipeline_mode = #tpu.pipeline_mode<synchronous>, transform_indices = @transform_2, window_bounds = array<i64: 4, 9>}, {transform_indices = @transform_3, window_bounds = array<i64: 2, 4, 256>}]} {
    %cst = arith.constant 1.000000e+00 : bf16
    %0 = vector.broadcast %cst : bf16 to vector<1x768xbf16>
    %c72 = arith.constant 72 : index
    %c0 = arith.constant 0 : index
    %1 = vector.load %arg5[%c72, %c0] : memref<73x768xbf16, #tpu.memory_space<vmem>>, vector<1x768xbf16>
    tpu.vector_store %arg5[%c72, %c0], %0 {strides = array<i32>} : memref<73x768xbf16, #tpu.memory_space<vmem>>, vector<1x768xbf16>,
    %c8 = arith.constant 8 : index
    %c0_0 = arith.constant 0 : index
    %2 = vector.load %arg6[%c8, %c0_0] : memref<9x768xbf16, #tpu.memory_space<vmem>>, vector<1x768xbf16>
    tpu.vector_store %arg6[%c8, %c0_0], %0 {strides = array<i32>} : memref<9x768xbf16, #tpu.memory_space<vmem>>, vector<1x768xbf16>,
    %c0_1 = arith.constant 0 : index
    %c0_2 = arith.constant 0 : index
    %c0_3 = arith.constant 0 : index
    %3 = vector.load %arg1[%c0_1, %c0_2, %c0_3] : memref<2x8x384xbf16, #tpu.memory_space<vmem>>, vector<1x8x288xbf16>
    %4 = vector.shape_cast %3 : vector<1x8x288xbf16> to vector<8x288xbf16>
    %c0_4 = arith.constant 0 : index
    %c0_5 = arith.constant 0 : index
    %5 = vector.load %arg5[%c0_4, %c0_5] : memref<73x768xbf16, #tpu.memory_space<vmem>>, vector<8x288xbf16>
    tpu.vector_store %arg5[%c0_4, %c0_5], %4 {strides = array<i32>} : memref<73x768xbf16, #tpu.memory_space<vmem>>, vector<8x288xbf16>,
    %c0_6 = arith.constant 0 : index
    %c0_7 = arith.constant 0 : index
    %c1 = arith.constant 1 : index
    %6 = vector.load %arg1[%c0_6, %c0_7, %c1] : memref<2x8x384xbf16, #tpu.memory_space<vmem>>, vector<1x8x288xbf16>
    %7 = vector.shape_cast %6 : vector<1x8x288xbf16> to vector<8x288xbf16>
    %c8_8 = arith.constant 8 : index
    %c0_9 = arith.constant 0 : index
    %8 = vector.load %arg5[%c8_8, %c0_9] : memref<73x768xbf16, #tpu.memory_space<vmem>>, vector<8x288xbf16>
    tpu.vector_store %arg5[%c8_8, %c0_9], %7 {strides = array<i32>} : memref<73x768xbf16, #tpu.memory_space<vmem>>, vector<8x288xbf16>,
    %c0_10 = arith.constant 0 : index
    %c0_11 = arith.constant 0 : index
    %c2 = arith.constant 2 : index
    %9 = vector.load %arg1[%c0_10, %c0_11, %c2] : memref<2x8x384xbf16, #tpu.memory_space<vmem>>, vector<1x8x288xbf16>
    %10 = vector.shape_cast %9 : vector<1x8x288xbf16> to vector<8x288xbf16>
    %c16 = arith.constant 16 : index
    %c0_12 = arith.constant 0 : index
    %11 = vector.load %arg5[%c16, %c0_12] : memref<73x768xbf16, #tpu.memory_space<vmem>>, vector<8x288xbf16>
    tpu.vector_store %arg5[%c16, %c0_12], %10 {strides = array<i32>} : memref<73x768xbf16, #tpu.memory_space<vmem>>, vector<8x288xbf16>,
    %c0_13 = arith.constant 0 : index
    %c0_14 = arith.constant 0 : index
    %c18 = arith.constant 18 : index
    %12 = vector.load %arg1[%c0_13, %c0_14, %c18] : memref<2x8x384xbf16, #tpu.memory_space<vmem>>, vector<1x8x288xbf16>
    %13 = vector.shape_cast %12 : vector<1x8x288xbf16> to vector<8x288xbf16>
    %c24 = arith.constant 24 : index
    %c0_15 = arith.constant 0 : index
    %14 = vector.load %arg5[%c24, %c0_15] : memref<73x768xbf16, #tpu.memory_space<vmem>>, vector<8x288xbf16>
    tpu.vector_store %arg5[%c24, %c0_15], %13 {strides = array<i32>} : memref<73x768xbf16, #tpu.memory_space<vmem>>, vector<8x288xbf16>,
    %c0_16 = arith.constant 0 : index
    %c0_17 = arith.constant 0 : index
    %c19 = arith.constant 19 : index
    %15 = vector.load %arg1[%c0_16, %c0_17, %c19] : memref<2x8x384xbf16, #tpu.memory_space<vmem>>, vector<1x8x288xbf16>
    %16 = vector.shape_cast %15 : vector<1x8x288xbf16> to vector<8x288xbf16>
    %c32 = arith.constant 32 : index
    %c0_18 = arith.constant 0 : index
    %17 = vector.load %arg5[%c32, %c0_18] : memref<73x768xbf16, #tpu.memory_space<vmem>>, vector<8x288xbf16>
    tpu.vector_store %arg5[%c32, %c0_18], %16 {strides = array<i32>} : memref<73x768xbf16, #tpu.memory_space<vmem>>, vector<8x288xbf16>,
    %c0_19 = arith.constant 0 : index
    %c0_20 = arith.constant 0 : index
    %c20 = arith.constant 20 : index
    %18 = vector.load %arg1[%c0_19, %c0_20, %c20] : memref<2x8x384xbf16, #tpu.memory_space<vmem>>, vector<1x8x288xbf16>
    %19 = vector.shape_cast %18 : vector<1x8x288xbf16> to vector<8x288xbf16>
    %c40 = arith.constant 40 : index
    %c0_21 = arith.constant 0 : index
    %20 = vector.load %arg5[%c40, %c0_21] : memref<73x768xbf16, #tpu.memory_space<vmem>>, vector<8x288xbf16>
    tpu.vector_store %arg5[%c40, %c0_21], %19 {strides = array<i32>} : memref<73x768xbf16, #tpu.memory_space<vmem>>, vector<8x288xbf16>,
    %c0_22 = arith.constant 0 : index
    %c0_23 = arith.constant 0 : index
    %c36 = arith.constant 36 : index
    %21 = vector.load %arg1[%c0_22, %c0_23, %c36] : memref<2x8x384xbf16, #tpu.memory_space<vmem>>, vector<1x8x288xbf16>
    %22 = vector.shape_cast %21 : vector<1x8x288xbf16> to vector<8x288xbf16>
    %c48 = arith.constant 48 : index
    %c0_24 = arith.constant 0 : index
    %23 = vector.load %arg5[%c48, %c0_24] : memref<73x768xbf16, #tpu.memory_space<vmem>>, vector<8x288xbf16>
    tpu.vector_store %arg5[%c48, %c0_24], %22 {strides = array<i32>} : memref<73x768xbf16, #tpu.memory_space<vmem>>, vector<8x288xbf16>,
    %c0_25 = arith.constant 0 : index
    %c0_26 = arith.constant 0 : index
    %c37 = arith.constant 37 : index
    %24 = vector.load %arg1[%c0_25, %c0_26, %c37] : memref<2x8x384xbf16, #tpu.memory_space<vmem>>, vector<1x8x288xbf16>
    %25 = vector.shape_cast %24 : vector<1x8x288xbf16> to vector<8x288xbf16>
    %c56 = arith.constant 56 : index
    %c0_27 = arith.constant 0 : index
    %26 = vector.load %arg5[%c56, %c0_27] : memref<73x768xbf16, #tpu.memory_space<vmem>>, vector<8x288xbf16>
    tpu.vector_store %arg5[%c56, %c0_27], %25 {strides = array<i32>} : memref<73x768xbf16, #tpu.memory_space<vmem>>, vector<8x288xbf16>,
    %c0_28 = arith.constant 0 : index
    %c0_29 = arith.constant 0 : index
    %c38 = arith.constant 38 : index
    %27 = vector.load %arg1[%c0_28, %c0_29, %c38] : memref<2x8x384xbf16, #tpu.memory_space<vmem>>, vector<1x8x288xbf16>
    %28 = vector.shape_cast %27 : vector<1x8x288xbf16> to vector<8x288xbf16>
    %c64 = arith.constant 64 : index
    %c0_30 = arith.constant 0 : index
    %29 = vector.load %arg5[%c64, %c0_30] : memref<73x768xbf16, #tpu.memory_space<vmem>>, vector<8x288xbf16>
    tpu.vector_store %arg5[%c64, %c0_30], %28 {strides = array<i32>} : memref<73x768xbf16, #tpu.memory_space<vmem>>, vector<8x288xbf16>,
    %c1_31 = arith.constant 1 : index
    %c0_32 = arith.constant 0 : index
    %c0_33 = arith.constant 0 : index
    %30 = vector.load %arg1[%c1_31, %c0_32, %c0_33] : memref<2x8x384xbf16, #tpu.memory_space<vmem>>, vector<1x8x288xbf16>
    %31 = vector.shape_cast %30 : vector<1x8x288xbf16> to vector<8x288xbf16>
    %c0_34 = arith.constant 0 : index
    %c384 = arith.constant 384 : index
    %32 = vector.load %arg5[%c0_34, %c384] : memref<73x768xbf16, #tpu.memory_space<vmem>>, vector<8x288xbf16>
    tpu.vector_store %arg5[%c0_34, %c384], %31 {strides = array<i32>} : memref<73x768xbf16, #tpu.memory_space<vmem>>, vector<8x288xbf16>,
    %c1_35 = arith.constant 1 : index
    %c0_36 = arith.constant 0 : index
    %c1_37 = arith.constant 1 : index
    %33 = vector.load %arg1[%c1_35, %c0_36, %c1_37] : memref<2x8x384xbf16, #tpu.memory_space<vmem>>, vector<1x8x288xbf16>
    %34 = vector.shape_cast %33 : vector<1x8x288xbf16> to vector<8x288xbf16>
    %c8_38 = arith.constant 8 : index
    %c384_39 = arith.constant 384 : index
    %35 = vector.load %arg5[%c8_38, %c384_39] : memref<73x768xbf16, #tpu.memory_space<vmem>>, vector<8x288xbf16>
    tpu.vector_store %arg5[%c8_38, %c384_39], %34 {strides = array<i32>} : memref<73x768xbf16, #tpu.memory_space<vmem>>, vector<8x288xbf16>,
    %c1_40 = arith.constant 1 : index
    %c0_41 = arith.constant 0 : index
    %c2_42 = arith.constant 2 : index
    %36 = vector.load %arg1[%c1_40, %c0_41, %c2_42] : memref<2x8x384xbf16, #tpu.memory_space<vmem>>, vector<1x8x288xbf16>
    %37 = vector.shape_cast %36 : vector<1x8x288xbf16> to vector<8x288xbf16>
    %c16_43 = arith.constant 16 : index
    %c384_44 = arith.constant 384 : index
    %38 = vector.load %arg5[%c16_43, %c384_44] : memref<73x768xbf16, #tpu.memory_space<vmem>>, vector<8x288xbf16>
    tpu.vector_store %arg5[%c16_43, %c384_44], %37 {strides = array<i32>} : memref<73x768xbf16, #tpu.memory_space<vmem>>, vector<8x288xbf16>,
    %c1_45 = arith.constant 1 : index
    %c0_46 = arith.constant 0 : index
    %c18_47 = arith.constant 18 : index
    %39 = vector.load %arg1[%c1_45, %c0_46, %c18_47] : memref<2x8x384xbf16, #tpu.memory_space<vmem>>, vector<1x8x288xbf16>
    %40 = vector.shape_cast %39 : vector<1x8x288xbf16> to vector<8x288xbf16>
    %c24_48 = arith.constant 24 : index
    %c384_49 = arith.constant 384 : index
    %41 = vector.load %arg5[%c24_48, %c384_49] : memref<73x768xbf16, #tpu.memory_space<vmem>>, vector<8x288xbf16>
    tpu.vector_store %arg5[%c24_48, %c384_49], %40 {strides = array<i32>} : memref<73x768xbf16, #tpu.memory_space<vmem>>, vector<8x288xbf16>,
    %c1_50 = arith.constant 1 : index
    %c0_51 = arith.constant 0 : index
    %c19_52 = arith.constant 19 : index
    %42 = vector.load %arg1[%c1_50, %c0_51, %c19_52] : memref<2x8x384xbf16, #tpu.memory_space<vmem>>, vector<1x8x288xbf16>
    %43 = vector.shape_cast %42 : vector<1x8x288xbf16> to vector<8x288xbf16>
    %c32_53 = arith.constant 32 : index
    %c384_54 = arith.constant 384 : index
    %44 = vector.load %arg5[%c32_53, %c384_54] : memref<73x768xbf16, #tpu.memory_space<vmem>>, vector<8x288xbf16>
    tpu.vector_store %arg5[%c32_53, %c384_54], %43 {strides = array<i32>} : memref<73x768xbf16, #tpu.memory_space<vmem>>, vector<8x288xbf16>,
    %c1_55 = arith.constant 1 : index
    %c0_56 = arith.constant 0 : index
    %c20_57 = arith.constant 20 : index
    %45 = vector.load %arg1[%c1_55, %c0_56, %c20_57] : memref<2x8x384xbf16, #tpu.memory_space<vmem>>, vector<1x8x288xbf16>
    %46 = vector.shape_cast %45 : vector<1x8x288xbf16> to vector<8x288xbf16>
    %c40_58 = arith.constant 40 : index
    %c384_59 = arith.constant 384 : index
    %47 = vector.load %arg5[%c40_58, %c384_59] : memref<73x768xbf16, #tpu.memory_space<vmem>>, vector<8x288xbf16>
    tpu.vector_store %arg5[%c40_58, %c384_59], %46 {strides = array<i32>} : memref<73x768xbf16, #tpu.memory_space<vmem>>, vector<8x288xbf16>,
    %c1_60 = arith.constant 1 : index
    %c0_61 = arith.constant 0 : index
    %c36_62 = arith.constant 36 : index
    %48 = vector.load %arg1[%c1_60, %c0_61, %c36_62] : memref<2x8x384xbf16, #tpu.memory_space<vmem>>, vector<1x8x288xbf16>
    %49 = vector.shape_cast %48 : vector<1x8x288xbf16> to vector<8x288xbf16>
    %c48_63 = arith.constant 48 : index
    %c384_64 = arith.constant 384 : index
    %50 = vector.load %arg5[%c48_63, %c384_64] : memref<73x768xbf16, #tpu.memory_space<vmem>>, vector<8x288xbf16>
    tpu.vector_store %arg5[%c48_63, %c384_64], %49 {strides = array<i32>} : memref<73x768xbf16, #tpu.memory_space<vmem>>, vector<8x288xbf16>,
    %c1_65 = arith.constant 1 : index
    %c0_66 = arith.constant 0 : index
    %c37_67 = arith.constant 37 : index
    %51 = vector.load %arg1[%c1_65, %c0_66, %c37_67] : memref<2x8x384xbf16, #tpu.memory_space<vmem>>, vector<1x8x288xbf16>
    %52 = vector.shape_cast %51 : vector<1x8x288xbf16> to vector<8x288xbf16>
    %c56_68 = arith.constant 56 : index
    %c384_69 = arith.constant 384 : index
    %53 = vector.load %arg5[%c56_68, %c384_69] : memref<73x768xbf16, #tpu.memory_space<vmem>>, vector<8x288xbf16>
    tpu.vector_store %arg5[%c56_68, %c384_69], %52 {strides = array<i32>} : memref<73x768xbf16, #tpu.memory_space<vmem>>, vector<8x288xbf16>,
    %c1_70 = arith.constant 1 : index
    %c0_71 = arith.constant 0 : index
    %c38_72 = arith.constant 38 : index
    %54 = vector.load %arg1[%c1_70, %c0_71, %c38_72] : memref<2x8x384xbf16, #tpu.memory_space<vmem>>, vector<1x8x288xbf16>
    %55 = vector.shape_cast %54 : vector<1x8x288xbf16> to vector<8x288xbf16>
    %c64_73 = arith.constant 64 : index
    %c384_74 = arith.constant 384 : index
    %56 = vector.load %arg5[%c64_73, %c384_74] : memref<73x768xbf16, #tpu.memory_space<vmem>>, vector<8x288xbf16>
    tpu.vector_store %arg5[%c64_73, %c384_74], %55 {strides = array<i32>} : memref<73x768xbf16, #tpu.memory_space<vmem>>, vector<8x288xbf16>,
    %c0_75 = arith.constant 0 : index
    %c0_76 = arith.constant 0 : index
    %57 = vector.load %arg2[%c0_75, %c0_76] : memref<8x73xbf16, #tpu.memory_space<vmem>>, vector<8x73xbf16>
    %c0_77 = arith.constant 0 : index
    %c0_78 = arith.constant 0 : index
    %58 = vector.load %arg5[%c0_77, %c0_78] : memref<73x768xbf16, #tpu.memory_space<vmem>>, vector<73x768xbf16>
    %cst_79 = arith.constant dense<0.000000e+00> : vector<8x768xf32>
    %59 = tpu.matmul %57, %58, %cst_79 {dimension_numbers = #tpu.dot_dimension_numbers<[1], [0], [0], [1], [0, 0, 1, 1], [], []>} : vector<8x73xbf16>, vector<73x768xbf16>, vector<8x768xf32> -> vector<8x768xf32>
    %cst_80 = arith.constant 0.000000e+00 : f32
    %60 = vector.broadcast %cst_80 : f32 to vector<8x768xf32>
    %61 = arith.maximumf %59, %60 : vector<8x768xf32>
    %62 = arith.truncf %61 : vector<8x768xf32> to vector<8x768xbf16>
    %c0_81 = arith.constant 0 : index
    %c0_82 = arith.constant 0 : index
    %63 = vector.load %arg6[%c0_81, %c0_82] : memref<9x768xbf16, #tpu.memory_space<vmem>>, vector<8x768xbf16>
    tpu.vector_store %arg6[%c0_81, %c0_82], %62 {strides = array<i32>} : memref<9x768xbf16, #tpu.memory_space<vmem>>, vector<8x768xbf16>,
    %c0_83 = arith.constant 0 : index
    %c0_84 = arith.constant 0 : index
    %64 = vector.load %arg3[%c0_83, %c0_84] : memref<4x9xbf16, #tpu.memory_space<vmem>>, vector<4x9xbf16>
    %c0_85 = arith.constant 0 : index
    %c0_86 = arith.constant 0 : index
    %65 = vector.load %arg6[%c0_85, %c0_86] : memref<9x768xbf16, #tpu.memory_space<vmem>>, vector<9x768xbf16>
    %cst_87 = arith.constant dense<0.000000e+00> : vector<4x768xf32>
    %66 = tpu.matmul %64, %65, %cst_87 {dimension_numbers = #tpu.dot_dimension_numbers<[1], [0], [0], [1], [0, 0, 1, 1], [], []>} : vector<4x9xbf16>, vector<9x768xbf16>, vector<4x768xf32> -> vector<4x768xf32>
    %cst_88 = arith.constant 0.000000e+00 : f32
    %67 = vector.broadcast %cst_88 : f32 to vector<4x768xf32>
    %68 = arith.maximumf %66, %67 : vector<4x768xf32>
    %69 = arith.truncf %68 : vector<4x768xf32> to vector<4x768xbf16>
    %70 = vector.extract_strided_slice %69 {offsets = [0, 0], sizes = [4, 16], strides = [1, 1]} : vector<4x768xbf16> to vector<4x16xbf16>
    %c0_89 = arith.constant 0 : index
    %c0_90 = arith.constant 0 : index
    %c0_91 = arith.constant 0 : index
    %71 = vector.load %arg4[%c0_89, %c0_90, %c0_91] : memref<2x4x256xbf16, #tpu.memory_space<vmem>>, vector<1x4x16xbf16>
    %72 = vector.shape_cast %71 : vector<1x4x16xbf16> to vector<4x16xbf16>
    %73 = vector.shape_cast %70 : vector<4x16xbf16> to vector<1x4x16xbf16>
    tpu.vector_store %arg4[%c0_89, %c0_90, %c0_91], %73 {strides = array<i32>} : memref<2x4x256xbf16, #tpu.memory_space<vmem>>, vector<1x4x16xbf16>,
    %74 = vector.extract_strided_slice %69 {offsets = [0, 18], sizes = [4, 16], strides = [1, 1]} : vector<4x768xbf16> to vector<4x16xbf16>
    %c0_92 = arith.constant 0 : index
    %c0_93 = arith.constant 0 : index
    %c16_94 = arith.constant 16 : index
    %75 = vector.load %arg4[%c0_92, %c0_93, %c16_94] : memref<2x4x256xbf16, #tpu.memory_space<vmem>>, vector<1x4x16xbf16>
    %76 = vector.shape_cast %75 : vector<1x4x16xbf16> to vector<4x16xbf16>
    %77 = vector.shape_cast %74 : vector<4x16xbf16> to vector<1x4x16xbf16>
    tpu.vector_store %arg4[%c0_92, %c0_93, %c16_94], %77 {strides = array<i32>} : memref<2x4x256xbf16, #tpu.memory_space<vmem>>, vector<1x4x16xbf16>,
    %78 = vector.extract_strided_slice %69 {offsets = [0, 36], sizes = [4, 16], strides = [1, 1]} : vector<4x768xbf16> to vector<4x16xbf16>
    %c0_95 = arith.constant 0 : index
    %c0_96 = arith.constant 0 : index
    %c32_97 = arith.constant 32 : index
    %79 = vector.load %arg4[%c0_95, %c0_96, %c32_97] : memref<2x4x256xbf16, #tpu.memory_space<vmem>>, vector<1x4x16xbf16>
    %80 = vector.shape_cast %79 : vector<1x4x16xbf16> to vector<4x16xbf16>
    %81 = vector.shape_cast %78 : vector<4x16xbf16> to vector<1x4x16xbf16>
    tpu.vector_store %arg4[%c0_95, %c0_96, %c32_97], %81 {strides = array<i32>} : memref<2x4x256xbf16, #tpu.memory_space<vmem>>, vector<1x4x16xbf16>,
    %82 = vector.extract_strided_slice %69 {offsets = [0, 54], sizes = [4, 16], strides = [1, 1]} : vector<4x768xbf16> to vector<4x16xbf16>
    %c0_98 = arith.constant 0 : index
    %c0_99 = arith.constant 0 : index
    %c48_100 = arith.constant 48 : index
    %83 = vector.load %arg4[%c0_98, %c0_99, %c48_100] : memref<2x4x256xbf16, #tpu.memory_space<vmem>>, vector<1x4x16xbf16>
    %84 = vector.shape_cast %83 : vector<1x4x16xbf16> to vector<4x16xbf16>
    %85 = vector.shape_cast %82 : vector<4x16xbf16> to vector<1x4x16xbf16>
    tpu.vector_store %arg4[%c0_98, %c0_99, %c48_100], %85 {strides = array<i32>} : memref<2x4x256xbf16, #tpu.memory_space<vmem>>, vector<1x4x16xbf16>,
    %86 = vector.extract_strided_slice %69 {offsets = [0, 72], sizes = [4, 16], strides = [1, 1]} : vector<4x768xbf16> to vector<4x16xbf16>
    %c0_101 = arith.constant 0 : index
    %c0_102 = arith.constant 0 : index
    %c64_103 = arith.constant 64 : index
    %87 = vector.load %arg4[%c0_101, %c0_102, %c64_103] : memref<2x4x256xbf16, #tpu.memory_space<vmem>>, vector<1x4x16xbf16>
    %88 = vector.shape_cast %87 : vector<1x4x16xbf16> to vector<4x16xbf16>
    %89 = vector.shape_cast %86 : vector<4x16xbf16> to vector<1x4x16xbf16>
    tpu.vector_store %arg4[%c0_101, %c0_102, %c64_103], %89 {strides = array<i32>} : memref<2x4x256xbf16, #tpu.memory_space<vmem>>, vector<1x4x16xbf16>,
    %90 = vector.extract_strided_slice %69 {offsets = [0, 90], sizes = [4, 16], strides = [1, 1]} : vector<4x768xbf16> to vector<4x16xbf16>
    %c0_104 = arith.constant 0 : index
    %c0_105 = arith.constant 0 : index
    %c80 = arith.constant 80 : index
    %91 = vector.load %arg4[%c0_104, %c0_105, %c80] : memref<2x4x256xbf16, #tpu.memory_space<vmem>>, vector<1x4x16xbf16>
    %92 = vector.shape_cast %91 : vector<1x4x16xbf16> to vector<4x16xbf16>
    %93 = vector.shape_cast %90 : vector<4x16xbf16> to vector<1x4x16xbf16>
    tpu.vector_store %arg4[%c0_104, %c0_105, %c80], %93 {strides = array<i32>} : memref<2x4x256xbf16, #tpu.memory_space<vmem>>, vector<1x4x16xbf16>,
    %94 = vector.extract_strided_slice %69 {offsets = [0, 108], sizes = [4, 16], strides = [1, 1]} : vector<4x768xbf16> to vector<4x16xbf16>
    %c0_106 = arith.constant 0 : index
    %c0_107 = arith.constant 0 : index
    %c96 = arith.constant 96 : index
    %95 = vector.load %arg4[%c0_106, %c0_107, %c96] : memref<2x4x256xbf16, #tpu.memory_space<vmem>>, vector<1x4x16xbf16>
    %96 = vector.shape_cast %95 : vector<1x4x16xbf16> to vector<4x16xbf16>
    %97 = vector.shape_cast %94 : vector<4x16xbf16> to vector<1x4x16xbf16>
    tpu.vector_store %arg4[%c0_106, %c0_107, %c96], %97 {strides = array<i32>} : memref<2x4x256xbf16, #tpu.memory_space<vmem>>, vector<1x4x16xbf16>,
    %98 = vector.extract_strided_slice %69 {offsets = [0, 126], sizes = [4, 16], strides = [1, 1]} : vector<4x768xbf16> to vector<4x16xbf16>
    %c0_108 = arith.constant 0 : index
    %c0_109 = arith.constant 0 : index
    %c112 = arith.constant 112 : index
    %99 = vector.load %arg4[%c0_108, %c0_109, %c112] : memref<2x4x256xbf16, #tpu.memory_space<vmem>>, vector<1x4x16xbf16>
    %100 = vector.shape_cast %99 : vector<1x4x16xbf16> to vector<4x16xbf16>
    %101 = vector.shape_cast %98 : vector<4x16xbf16> to vector<1x4x16xbf16>
    tpu.vector_store %arg4[%c0_108, %c0_109, %c112], %101 {strides = array<i32>} : memref<2x4x256xbf16, #tpu.memory_space<vmem>>, vector<1x4x16xbf16>,
    %102 = vector.extract_strided_slice %69 {offsets = [0, 144], sizes = [4, 16], strides = [1, 1]} : vector<4x768xbf16> to vector<4x16xbf16>
    %c0_110 = arith.constant 0 : index
    %c0_111 = arith.constant 0 : index
    %c128 = arith.constant 128 : index
    %103 = vector.load %arg4[%c0_110, %c0_111, %c128] : memref<2x4x256xbf16, #tpu.memory_space<vmem>>, vector<1x4x16xbf16>
    %104 = vector.shape_cast %103 : vector<1x4x16xbf16> to vector<4x16xbf16>
    %105 = vector.shape_cast %102 : vector<4x16xbf16> to vector<1x4x16xbf16>
    tpu.vector_store %arg4[%c0_110, %c0_111, %c128], %105 {strides = array<i32>} : memref<2x4x256xbf16, #tpu.memory_space<vmem>>, vector<1x4x16xbf16>,
    %106 = vector.extract_strided_slice %69 {offsets = [0, 162], sizes = [4, 16], strides = [1, 1]} : vector<4x768xbf16> to vector<4x16xbf16>
    %c0_112 = arith.constant 0 : index
    %c0_113 = arith.constant 0 : index
    %c144 = arith.constant 144 : index
    %107 = vector.load %arg4[%c0_112, %c0_113, %c144] : memref<2x4x256xbf16, #tpu.memory_space<vmem>>, vector<1x4x16xbf16>
    %108 = vector.shape_cast %107 : vector<1x4x16xbf16> to vector<4x16xbf16>
    %109 = vector.shape_cast %106 : vector<4x16xbf16> to vector<1x4x16xbf16>
    tpu.vector_store %arg4[%c0_112, %c0_113, %c144], %109 {strides = array<i32>} : memref<2x4x256xbf16, #tpu.memory_space<vmem>>, vector<1x4x16xbf16>,
    %110 = vector.extract_strided_slice %69 {offsets = [0, 180], sizes = [4, 16], strides = [1, 1]} : vector<4x768xbf16> to vector<4x16xbf16>
    %c0_114 = arith.constant 0 : index
    %c0_115 = arith.constant 0 : index
    %c160 = arith.constant 160 : index
    %111 = vector.load %arg4[%c0_114, %c0_115, %c160] : memref<2x4x256xbf16, #tpu.memory_space<vmem>>, vector<1x4x16xbf16>
    %112 = vector.shape_cast %111 : vector<1x4x16xbf16> to vector<4x16xbf16>
    %113 = vector.shape_cast %110 : vector<4x16xbf16> to vector<1x4x16xbf16>
    tpu.vector_store %arg4[%c0_114, %c0_115, %c160], %113 {strides = array<i32>} : memref<2x4x256xbf16, #tpu.memory_space<vmem>>, vector<1x4x16xbf16>,
    %114 = vector.extract_strided_slice %69 {offsets = [0, 198], sizes = [4, 16], strides = [1, 1]} : vector<4x768xbf16> to vector<4x16xbf16>
    %c0_116 = arith.constant 0 : index
    %c0_117 = arith.constant 0 : index
    %c176 = arith.constant 176 : index
    %115 = vector.load %arg4[%c0_116, %c0_117, %c176] : memref<2x4x256xbf16, #tpu.memory_space<vmem>>, vector<1x4x16xbf16>
    %116 = vector.shape_cast %115 : vector<1x4x16xbf16> to vector<4x16xbf16>
    %117 = vector.shape_cast %114 : vector<4x16xbf16> to vector<1x4x16xbf16>
    tpu.vector_store %arg4[%c0_116, %c0_117, %c176], %117 {strides = array<i32>} : memref<2x4x256xbf16, #tpu.memory_space<vmem>>, vector<1x4x16xbf16>,
    %118 = vector.extract_strided_slice %69 {offsets = [0, 216], sizes = [4, 16], strides = [1, 1]} : vector<4x768xbf16> to vector<4x16xbf16>
    %c0_118 = arith.constant 0 : index
    %c0_119 = arith.constant 0 : index
    %c192 = arith.constant 192 : index
    %119 = vector.load %arg4[%c0_118, %c0_119, %c192] : memref<2x4x256xbf16, #tpu.memory_space<vmem>>, vector<1x4x16xbf16>
    %120 = vector.shape_cast %119 : vector<1x4x16xbf16> to vector<4x16xbf16>
    %121 = vector.shape_cast %118 : vector<4x16xbf16> to vector<1x4x16xbf16>
    tpu.vector_store %arg4[%c0_118, %c0_119, %c192], %121 {strides = array<i32>} : memref<2x4x256xbf16, #tpu.memory_space<vmem>>, vector<1x4x16xbf16>,
    %122 = vector.extract_strided_slice %69 {offsets = [0, 234], sizes = [4, 16], strides = [1, 1]} : vector<4x768xbf16> to vector<4x16xbf16>
    %c0_120 = arith.constant 0 : index
    %c0_121 = arith.constant 0 : index
    %c208 = arith.constant 208 : index
    %123 = vector.load %arg4[%c0_120, %c0_121, %c208] : memref<2x4x256xbf16, #tpu.memory_space<vmem>>, vector<1x4x16xbf16>
    %124 = vector.shape_cast %123 : vector<1x4x16xbf16> to vector<4x16xbf16>
    %125 = vector.shape_cast %122 : vector<4x16xbf16> to vector<1x4x16xbf16>
    tpu.vector_store %arg4[%c0_120, %c0_121, %c208], %125 {strides = array<i32>} : memref<2x4x256xbf16, #tpu.memory_space<vmem>>, vector<1x4x16xbf16>,
    %126 = vector.extract_strided_slice %69 {offsets = [0, 252], sizes = [4, 16], strides = [1, 1]} : vector<4x768xbf16> to vector<4x16xbf16>
    %c0_122 = arith.constant 0 : index
    %c0_123 = arith.constant 0 : index
    %c224 = arith.constant 224 : index
    %127 = vector.load %arg4[%c0_122, %c0_123, %c224] : memref<2x4x256xbf16, #tpu.memory_space<vmem>>, vector<1x4x16xbf16>
    %128 = vector.shape_cast %127 : vector<1x4x16xbf16> to vector<4x16xbf16>
    %129 = vector.shape_cast %126 : vector<4x16xbf16> to vector<1x4x16xbf16>
    tpu.vector_store %arg4[%c0_122, %c0_123, %c224], %129 {strides = array<i32>} : memref<2x4x256xbf16, #tpu.memory_space<vmem>>, vector<1x4x16xbf16>,
    %130 = vector.extract_strided_slice %69 {offsets = [0, 270], sizes = [4, 16], strides = [1, 1]} : vector<4x768xbf16> to vector<4x16xbf16>
    %c0_124 = arith.constant 0 : index
    %c0_125 = arith.constant 0 : index
    %c240 = arith.constant 240 : index
    %131 = vector.load %arg4[%c0_124, %c0_125, %c240] : memref<2x4x256xbf16, #tpu.memory_space<vmem>>, vector<1x4x16xbf16>
    %132 = vector.shape_cast %131 : vector<1x4x16xbf16> to vector<4x16xbf16>
    %133 = vector.shape_cast %130 : vector<4x16xbf16> to vector<1x4x16xbf16>
    tpu.vector_store %arg4[%c0_124, %c0_125, %c240], %133 {strides = array<i32>} : memref<2x4x256xbf16, #tpu.memory_space<vmem>>, vector<1x4x16xbf16>,
    %134 = vector.extract_strided_slice %69 {offsets = [0, 384], sizes = [4, 16], strides = [1, 1]} : vector<4x768xbf16> to vector<4x16xbf16>
    %c1_126 = arith.constant 1 : index
    %c0_127 = arith.constant 0 : index
    %c0_128 = arith.constant 0 : index
    %135 = vector.load %arg4[%c1_126, %c0_127, %c0_128] : memref<2x4x256xbf16, #tpu.memory_space<vmem>>, vector<1x4x16xbf16>
    %136 = vector.shape_cast %135 : vector<1x4x16xbf16> to vector<4x16xbf16>
    %137 = vector.shape_cast %134 : vector<4x16xbf16> to vector<1x4x16xbf16>
    tpu.vector_store %arg4[%c1_126, %c0_127, %c0_128], %137 {strides = array<i32>} : memref<2x4x256xbf16, #tpu.memory_space<vmem>>, vector<1x4x16xbf16>,
    %138 = vector.extract_strided_slice %69 {offsets = [0, 402], sizes = [4, 16], strides = [1, 1]} : vector<4x768xbf16> to vector<4x16xbf16>
    %c1_129 = arith.constant 1 : index
    %c0_130 = arith.constant 0 : index
    %c16_131 = arith.constant 16 : index
    %139 = vector.load %arg4[%c1_129, %c0_130, %c16_131] : memref<2x4x256xbf16, #tpu.memory_space<vmem>>, vector<1x4x16xbf16>
    %140 = vector.shape_cast %139 : vector<1x4x16xbf16> to vector<4x16xbf16>
    %141 = vector.shape_cast %138 : vector<4x16xbf16> to vector<1x4x16xbf16>
    tpu.vector_store %arg4[%c1_129, %c0_130, %c16_131], %141 {strides = array<i32>} : memref<2x4x256xbf16, #tpu.memory_space<vmem>>, vector<1x4x16xbf16>,
    %142 = vector.extract_strided_slice %69 {offsets = [0, 420], sizes = [4, 16], strides = [1, 1]} : vector<4x768xbf16> to vector<4x16xbf16>
    %c1_132 = arith.constant 1 : index
    %c0_133 = arith.constant 0 : index
    %c32_134 = arith.constant 32 : index
    %143 = vector.load %arg4[%c1_132, %c0_133, %c32_134] : memref<2x4x256xbf16, #tpu.memory_space<vmem>>, vector<1x4x16xbf16>
    %144 = vector.shape_cast %143 : vector<1x4x16xbf16> to vector<4x16xbf16>
    %145 = vector.shape_cast %142 : vector<4x16xbf16> to vector<1x4x16xbf16>
    tpu.vector_store %arg4[%c1_132, %c0_133, %c32_134], %145 {strides = array<i32>} : memref<2x4x256xbf16, #tpu.memory_space<vmem>>, vector<1x4x16xbf16>,
    %146 = vector.extract_strided_slice %69 {offsets = [0, 438], sizes = [4, 16], strides = [1, 1]} : vector<4x768xbf16> to vector<4x16xbf16>
    %c1_135 = arith.constant 1 : index
    %c0_136 = arith.constant 0 : index
    %c48_137 = arith.constant 48 : index
    %147 = vector.load %arg4[%c1_135, %c0_136, %c48_137] : memref<2x4x256xbf16, #tpu.memory_space<vmem>>, vector<1x4x16xbf16>
    %148 = vector.shape_cast %147 : vector<1x4x16xbf16> to vector<4x16xbf16>
    %149 = vector.shape_cast %146 : vector<4x16xbf16> to vector<1x4x16xbf16>
    tpu.vector_store %arg4[%c1_135, %c0_136, %c48_137], %149 {strides = array<i32>} : memref<2x4x256xbf16, #tpu.memory_space<vmem>>, vector<1x4x16xbf16>,
    %150 = vector.extract_strided_slice %69 {offsets = [0, 456], sizes = [4, 16], strides = [1, 1]} : vector<4x768xbf16> to vector<4x16xbf16>
    %c1_138 = arith.constant 1 : index
    %c0_139 = arith.constant 0 : index
    %c64_140 = arith.constant 64 : index
    %151 = vector.load %arg4[%c1_138, %c0_139, %c64_140] : memref<2x4x256xbf16, #tpu.memory_space<vmem>>, vector<1x4x16xbf16>
    %152 = vector.shape_cast %151 : vector<1x4x16xbf16> to vector<4x16xbf16>
    %153 = vector.shape_cast %150 : vector<4x16xbf16> to vector<1x4x16xbf16>
    tpu.vector_store %arg4[%c1_138, %c0_139, %c64_140], %153 {strides = array<i32>} : memref<2x4x256xbf16, #tpu.memory_space<vmem>>, vector<1x4x16xbf16>,
    %154 = vector.extract_strided_slice %69 {offsets = [0, 474], sizes = [4, 16], strides = [1, 1]} : vector<4x768xbf16> to vector<4x16xbf16>
    %c1_141 = arith.constant 1 : index
    %c0_142 = arith.constant 0 : index
    %c80_143 = arith.constant 80 : index
    %155 = vector.load %arg4[%c1_141, %c0_142, %c80_143] : memref<2x4x256xbf16, #tpu.memory_space<vmem>>, vector<1x4x16xbf16>
    %156 = vector.shape_cast %155 : vector<1x4x16xbf16> to vector<4x16xbf16>
    %157 = vector.shape_cast %154 : vector<4x16xbf16> to vector<1x4x16xbf16>
    tpu.vector_store %arg4[%c1_141, %c0_142, %c80_143], %157 {strides = array<i32>} : memref<2x4x256xbf16, #tpu.memory_space<vmem>>, vector<1x4x16xbf16>,
    %158 = vector.extract_strided_slice %69 {offsets = [0, 492], sizes = [4, 16], strides = [1, 1]} : vector<4x768xbf16> to vector<4x16xbf16>
    %c1_144 = arith.constant 1 : index
    %c0_145 = arith.constant 0 : index
    %c96_146 = arith.constant 96 : index
    %159 = vector.load %arg4[%c1_144, %c0_145, %c96_146] : memref<2x4x256xbf16, #tpu.memory_space<vmem>>, vector<1x4x16xbf16>
    %160 = vector.shape_cast %159 : vector<1x4x16xbf16> to vector<4x16xbf16>
    %161 = vector.shape_cast %158 : vector<4x16xbf16> to vector<1x4x16xbf16>
    tpu.vector_store %arg4[%c1_144, %c0_145, %c96_146], %161 {strides = array<i32>} : memref<2x4x256xbf16, #tpu.memory_space<vmem>>, vector<1x4x16xbf16>,
    %162 = vector.extract_strided_slice %69 {offsets = [0, 510], sizes = [4, 16], strides = [1, 1]} : vector<4x768xbf16> to vector<4x16xbf16>
    %c1_147 = arith.constant 1 : index
    %c0_148 = arith.constant 0 : index
    %c112_149 = arith.constant 112 : index
    %163 = vector.load %arg4[%c1_147, %c0_148, %c112_149] : memref<2x4x256xbf16, #tpu.memory_space<vmem>>, vector<1x4x16xbf16>
    %164 = vector.shape_cast %163 : vector<1x4x16xbf16> to vector<4x16xbf16>
    %165 = vector.shape_cast %162 : vector<4x16xbf16> to vector<1x4x16xbf16>
    tpu.vector_store %arg4[%c1_147, %c0_148, %c112_149], %165 {strides = array<i32>} : memref<2x4x256xbf16, #tpu.memory_space<vmem>>, vector<1x4x16xbf16>,
    %166 = vector.extract_strided_slice %69 {offsets = [0, 528], sizes = [4, 16], strides = [1, 1]} : vector<4x768xbf16> to vector<4x16xbf16>
    %c1_150 = arith.constant 1 : index
    %c0_151 = arith.constant 0 : index
    %c128_152 = arith.constant 128 : index
    %167 = vector.load %arg4[%c1_150, %c0_151, %c128_152] : memref<2x4x256xbf16, #tpu.memory_space<vmem>>, vector<1x4x16xbf16>
    %168 = vector.shape_cast %167 : vector<1x4x16xbf16> to vector<4x16xbf16>
    %169 = vector.shape_cast %166 : vector<4x16xbf16> to vector<1x4x16xbf16>
    tpu.vector_store %arg4[%c1_150, %c0_151, %c128_152], %169 {strides = array<i32>} : memref<2x4x256xbf16, #tpu.memory_space<vmem>>, vector<1x4x16xbf16>,
    %170 = vector.extract_strided_slice %69 {offsets = [0, 546], sizes = [4, 16], strides = [1, 1]} : vector<4x768xbf16> to vector<4x16xbf16>
    %c1_153 = arith.constant 1 : index
    %c0_154 = arith.constant 0 : index
    %c144_155 = arith.constant 144 : index
    %171 = vector.load %arg4[%c1_153, %c0_154, %c144_155] : memref<2x4x256xbf16, #tpu.memory_space<vmem>>, vector<1x4x16xbf16>
    %172 = vector.shape_cast %171 : vector<1x4x16xbf16> to vector<4x16xbf16>
    %173 = vector.shape_cast %170 : vector<4x16xbf16> to vector<1x4x16xbf16>
    tpu.vector_store %arg4[%c1_153, %c0_154, %c144_155], %173 {strides = array<i32>} : memref<2x4x256xbf16, #tpu.memory_space<vmem>>, vector<1x4x16xbf16>,
    %174 = vector.extract_strided_slice %69 {offsets = [0, 564], sizes = [4, 16], strides = [1, 1]} : vector<4x768xbf16> to vector<4x16xbf16>
    %c1_156 = arith.constant 1 : index
    %c0_157 = arith.constant 0 : index
    %c160_158 = arith.constant 160 : index
    %175 = vector.load %arg4[%c1_156, %c0_157, %c160_158] : memref<2x4x256xbf16, #tpu.memory_space<vmem>>, vector<1x4x16xbf16>
    %176 = vector.shape_cast %175 : vector<1x4x16xbf16> to vector<4x16xbf16>
    %177 = vector.shape_cast %174 : vector<4x16xbf16> to vector<1x4x16xbf16>
    tpu.vector_store %arg4[%c1_156, %c0_157, %c160_158], %177 {strides = array<i32>} : memref<2x4x256xbf16, #tpu.memory_space<vmem>>, vector<1x4x16xbf16>,
    %178 = vector.extract_strided_slice %69 {offsets = [0, 582], sizes = [4, 16], strides = [1, 1]} : vector<4x768xbf16> to vector<4x16xbf16>
    %c1_159 = arith.constant 1 : index
    %c0_160 = arith.constant 0 : index
    %c176_161 = arith.constant 176 : index
    %179 = vector.load %arg4[%c1_159, %c0_160, %c176_161] : memref<2x4x256xbf16, #tpu.memory_space<vmem>>, vector<1x4x16xbf16>
    %180 = vector.shape_cast %179 : vector<1x4x16xbf16> to vector<4x16xbf16>
    %181 = vector.shape_cast %178 : vector<4x16xbf16> to vector<1x4x16xbf16>
    tpu.vector_store %arg4[%c1_159, %c0_160, %c176_161], %181 {strides = array<i32>} : memref<2x4x256xbf16, #tpu.memory_space<vmem>>, vector<1x4x16xbf16>,
    %182 = vector.extract_strided_slice %69 {offsets = [0, 600], sizes = [4, 16], strides = [1, 1]} : vector<4x768xbf16> to vector<4x16xbf16>
    %c1_162 = arith.constant 1 : index
    %c0_163 = arith.constant 0 : index
    %c192_164 = arith.constant 192 : index
    %183 = vector.load %arg4[%c1_162, %c0_163, %c192_164] : memref<2x4x256xbf16, #tpu.memory_space<vmem>>, vector<1x4x16xbf16>
    %184 = vector.shape_cast %183 : vector<1x4x16xbf16> to vector<4x16xbf16>
    %185 = vector.shape_cast %182 : vector<4x16xbf16> to vector<1x4x16xbf16>
    tpu.vector_store %arg4[%c1_162, %c0_163, %c192_164], %185 {strides = array<i32>} : memref<2x4x256xbf16, #tpu.memory_space<vmem>>, vector<1x4x16xbf16>,
    %186 = vector.extract_strided_slice %69 {offsets = [0, 618], sizes = [4, 16], strides = [1, 1]} : vector<4x768xbf16> to vector<4x16xbf16>
    %c1_165 = arith.constant 1 : index
    %c0_166 = arith.constant 0 : index
    %c208_167 = arith.constant 208 : index
    %187 = vector.load %arg4[%c1_165, %c0_166, %c208_167] : memref<2x4x256xbf16, #tpu.memory_space<vmem>>, vector<1x4x16xbf16>
    %188 = vector.shape_cast %187 : vector<1x4x16xbf16> to vector<4x16xbf16>
    %189 = vector.shape_cast %186 : vector<4x16xbf16> to vector<1x4x16xbf16>
    tpu.vector_store %arg4[%c1_165, %c0_166, %c208_167], %189 {strides = array<i32>} : memref<2x4x256xbf16, #tpu.memory_space<vmem>>, vector<1x4x16xbf16>,
    %190 = vector.extract_strided_slice %69 {offsets = [0, 636], sizes = [4, 16], strides = [1, 1]} : vector<4x768xbf16> to vector<4x16xbf16>
    %c1_168 = arith.constant 1 : index
    %c0_169 = arith.constant 0 : index
    %c224_170 = arith.constant 224 : index
    %191 = vector.load %arg4[%c1_168, %c0_169, %c224_170] : memref<2x4x256xbf16, #tpu.memory_space<vmem>>, vector<1x4x16xbf16>
    %192 = vector.shape_cast %191 : vector<1x4x16xbf16> to vector<4x16xbf16>
    %193 = vector.shape_cast %190 : vector<4x16xbf16> to vector<1x4x16xbf16>
    tpu.vector_store %arg4[%c1_168, %c0_169, %c224_170], %193 {strides = array<i32>} : memref<2x4x256xbf16, #tpu.memory_space<vmem>>, vector<1x4x16xbf16>,
    %194 = vector.extract_strided_slice %69 {offsets = [0, 654], sizes = [4, 16], strides = [1, 1]} : vector<4x768xbf16> to vector<4x16xbf16>
    %c1_171 = arith.constant 1 : index
    %c0_172 = arith.constant 0 : index
    %c240_173 = arith.constant 240 : index
    %195 = vector.load %arg4[%c1_171, %c0_172, %c240_173] : memref<2x4x256xbf16, #tpu.memory_space<vmem>>, vector<1x4x16xbf16>
    %196 = vector.shape_cast %195 : vector<1x4x16xbf16> to vector<4x16xbf16>
    %197 = vector.shape_cast %194 : vector<4x16xbf16> to vector<1x4x16xbf16>
    tpu.vector_store %arg4[%c1_171, %c0_172, %c240_173], %197 {strides = array<i32>} : memref<2x4x256xbf16, #tpu.memory_space<vmem>>, vector<1x4x16xbf16>,
    return
  }
  func.func @transform_0(%arg0: i32) -> (i32, i32, i32) {
    %c0_i32 = arith.constant 0 : i32
    %c0_i32_0 = arith.constant 0 : i32
    %c0_i32_1 = arith.constant 0 : i32
    return %arg0, %c0_i32, %c0_i32_0 : i32, i32, i32
  }
  func.func @transform_1(%arg0: i32) -> (i32, i32) {
    %c0_i32 = arith.constant 0 : i32
    %c0_i32_0 = arith.constant 0 : i32
    %c0_i32_1 = arith.constant 0 : i32
    return %c0_i32, %c0_i32_0 : i32, i32
  }
  func.func @transform_2(%arg0: i32) -> (i32, i32) {
    %c0_i32 = arith.constant 0 : i32
    %c0_i32_0 = arith.constant 0 : i32
    %c0_i32_1 = arith.constant 0 : i32
    return %c0_i32, %c0_i32_0 : i32, i32
  }
  func.func @transform_3(%arg0: i32) -> (i32, i32, i32) {
    %c0_i32 = arith.constant 0 : i32
    %c0_i32_0 = arith.constant 0 : i32
    %c0_i32_1 = arith.constant 0 : i32
    return %arg0, %c0_i32, %c0_i32_0 : i32, i32, i32
  }
}

</mosaic_0001>

<llo_original>
// kernel: unet_up_block.1
$region0: #{unet_up_block.1}
  #allocation0 [shape = 'u32[]', space=smem, size = 0x4, offset = 0x4, fixed_abs, tag = 'smem constant byte address 0x4 - core index']
  #allocation1 [shape = 'u32[72,128]{1,0:T(1,128)}', space=vmem, size = 0x9000, scoped, tag = 'internal scratch']
  #allocation2 [shape = 'bf16[73,768]{1,0:T(8,128)(2,1)}', space=vmem, size = 0x1e000, scoped, tag = 'scratch operand']
  #allocation3 [shape = 'bf16[9,768]{1,0:T(8,128)(2,1)}', space=vmem, size = 0x6000, scoped, tag = 'scratch operand']
  %s0 = inlined_call_operand.vmem [shape: bf16[2,8,384], index: 0, kind: input, shape index: {}]
  %s1 = inlined_call_operand.vmem [shape: bf16[8,73], index: 1, kind: input, shape index: {}]
  %s2 = inlined_call_operand.vmem [shape: bf16[4,9], index: 2, kind: input, shape index: {}]
  %s3 = inlined_call_operand.vmem [shape: bf16[2,4,256], index: 3, kind: output, shape index: {}]
  %s4 = sld [smem:[#allocation0]]
  $region22: #{unet_up_block.1} parent=0
    _
  %s6 = ssub.s32 1, %s4
  %s7 = scalar_select 0, %s6, %s4
  // Predicated region
  $region2: #{unet_up_block.1} parent=0 // pred_check
    _
  $region3: #{unet_up_block.1} parent=0 // pred_check_branch
    %9 = sbr.rel (0) target = $region5
  $region4: #{unet_up_block.1} parent=0 // pred_region
    _
  $region5: #{unet_up_block.1} parent=0 // pred_fallthru
    _
  // Predicated region
  $region6: #{unet_up_block.1} parent=0 // pred_check
    _
  $region7: #{unet_up_block.1} parent=0 // pred_check_branch
    %11 = sbr.rel (0) target = $region9
  $region8: #{unet_up_block.1} parent=0 // pred_region
    _
  $region9: #{unet_up_block.1} parent=0 // pred_fallthru
    _
  // Predicated region
  $region10: #{unet_up_block.1} parent=0 // pred_check
    _
  $region11: #{unet_up_block.1} parent=0 // pred_check_branch
    %13 = sbr.rel (0) target = $region13
  $region12: #{unet_up_block.1} parent=0 // pred_region
    _
  $region13: #{unet_up_block.1} parent=0 // pred_fallthru
    _
  %vm16 = vcmask 1040384
  %vm17 = vsmask.f32 256
  %vm18 = vmand %vm16, %vm17
  %vm19 = vcmask 1044484
  %vm20 = vsmask.f32 4352
  %vm21 = vmand %vm19, %vm20
  %vm22 = vmor %vm21, %vm18
  %v23 = vld [vmem:[#allocation2 + $0xd8] sm:$0x11]
  %v24 = vsel %vm22, 1065369472, %v23
  %25 = vst [vmem:[#allocation2 + $0xd8] sm:$0x11] %v24
  %v26 = vld [vmem:[#allocation2 + $0xe0] sm:$0x11]
  %v27 = vsel %vm22, 1065369472, %v26
  %28 = vst [vmem:[#allocation2 + $0xe0] sm:$0x11] %v27
  %v29 = vld [vmem:[#allocation2 + $0xe8] sm:$0x11]
  %v30 = vsel %vm22, 1065369472, %v29
  %31 = vst [vmem:[#allocation2 + $0xe8] sm:$0x11] %v30
  %v32 = vld [vmem:[#allocation3 + $0x18] sm:$0x11]
  %v33 = vsel %vm22, 1065369472, %v32
  %34 = vst [vmem:[#allocation3 + $0x18] sm:$0x11] %v33
  %v35 = vld [vmem:[#allocation3 + $0x20] sm:$0x11]
  %v36 = vsel %vm22, 1065369472, %v35
  %37 = vst [vmem:[#allocation3 + $0x20] sm:$0x11] %v36
  %v38 = vld [vmem:[#allocation3 + $0x28] sm:$0x11]
  %v39 = vsel %vm22, 1065369472, %v38
  %40 = vst [vmem:[#allocation3 + $0x28] sm:$0x11] %v39
  %v41 = vld [vmem:[%s0] sm:$0xff]
  %v42 = vld [vmem:[%s0 + $0x8] sm:$0xf]
  %43 = vst [vmem:[#allocation2] sm:$0xff] %v41
  %vm44 = vcmask 257024
  %45 = vst.msk [vmem:[#allocation2 + $0x8] sm:$0xf] %vm44, %v42
  %v46 = vld [vmem:[%s0] sm:$0xff]
  %v47 = vld [vmem:[%s0 + $0x8] sm:$0xf]
  %50 = vrot.lane.b32.xlu0 %v46, 127
  %v51 = vpop.permute.xlu0 %50
  %52 = vrot.lane.b32.xlu0 %v47, 127
  %v53 = vpop.permute.xlu0 %52
  %v54 = vrot.slane %v51, 4
  %v55 = vrot.slane %v53, 4
  %vm56 = vcmask 1043456
  %v57 = vsel %vm56, %v54, %v55
  %vm58 = vcmask 1039360
  %v59 = vsel %vm58, %v51, %v57
  %62 = vst [vmem:[#allocation2 + $0x18] sm:$0xff] %v59
  %63 = vst.msk [vmem:[#allocation2 + $0x20] sm:$0xf] %vm44, %v53
  %v64 = vld [vmem:[%s0] sm:$0xff]
  %v65 = vld [vmem:[%s0 + $0x8] sm:$0xf]
  %68 = vrot.lane.b32.xlu0 %v64, 126
  %v69 = vpop.permute.xlu0 %68
  %70 = vrot.lane.b32.xlu0 %v65, 126
  %v71 = vpop.permute.xlu0 %70
  %v72 = vrot.slane %v69, 4
  %v73 = vrot.slane %v71, 4
  %v74 = vsel %vm56, %v72, %v73
  %vm75 = vcmask 1031168
  %v76 = vsel %vm75, %v69, %v74
  %79 = vst [vmem:[#allocation2 + $0x30] sm:$0xff] %v76
  %80 = vst.msk [vmem:[#allocation2 + $0x38] sm:$0xf] %vm44, %v71
  %v81 = vld [vmem:[%s0] sm:$0xff]
  %v82 = vld [vmem:[%s0 + $0x8] sm:$0xf]
  %85 = vrot.lane.b32.xlu0 %v81, 110
  %v86 = vpop.permute.xlu0 %85
  %87 = vrot.lane.b32.xlu0 %v82, 110
  %v88 = vpop.permute.xlu0 %87
  %v89 = vrot.slane %v86, 4
  %v90 = vrot.slane %v88, 4
  %v91 = vsel %vm56, %v89, %v90
  %vm92 = vcmask 900096
  %v93 = vsel %vm92, %v86, %v91
  %96 = vst [vmem:[#allocation2 + $0x48] sm:$0xff] %v93
  %97 = vst.msk [vmem:[#allocation2 + $0x50] sm:$0xf] %vm44, %v88
  %v98 = vld [vmem:[%s0] sm:$0xff]
  %v99 = vld [vmem:[%s0 + $0x8] sm:$0xf]
  %102 = vrot.lane.b32.xlu0 %v98, 109
  %v103 = vpop.permute.xlu0 %102
  %104 = vrot.lane.b32.xlu0 %v99, 109
  %v105 = vpop.permute.xlu0 %104
  %v106 = vrot.slane %v103, 4
  %v107 = vrot.slane %v105, 4
  %v108 = vsel %vm56, %v106, %v107
  %vm109 = vcmask 891904
  %v110 = vsel %vm109, %v103, %v108
  %113 = vst [vmem:[#allocation2 + $0x60] sm:$0xff] %v110
  %114 = vst.msk [vmem:[#allocation2 + $0x68] sm:$0xf] %vm44, %v105
  %v115 = vld [vmem:[%s0] sm:$0xff]
  %v116 = vld [vmem:[%s0 + $0x8] sm:$0xf]
  %119 = vrot.lane.b32.xlu0 %v115, 108
  %v120 = vpop.permute.xlu0 %119
  %121 = vrot.lane.b32.xlu0 %v116, 108
  %v122 = vpop.permute.xlu0 %121
  %v123 = vrot.slane %v120, 4
  %v124 = vrot.slane %v122, 4
  %v125 = vsel %vm56, %v123, %v124
  %vm126 = vcmask 883712
  %v127 = vsel %vm126, %v120, %v125
  %130 = vst [vmem:[#allocation2 + $0x78] sm:$0xff] %v127
  %131 = vst.msk [vmem:[#allocation2 + $0x80] sm:$0xf] %vm44, %v122
  %v132 = vld [vmem:[%s0] sm:$0xff]
  %v133 = vld [vmem:[%s0 + $0x8] sm:$0xf]
  %136 = vrot.lane.b32.xlu0 %v132, 92
  %v137 = vpop.permute.xlu0 %136
  %138 = vrot.lane.b32.xlu0 %v133, 92
  %v139 = vpop.permute.xlu0 %138
  %v140 = vrot.slane %v137, 4
  %v141 = vrot.slane %v139, 4
  %v142 = vsel %vm56, %v140, %v141
  %vm143 = vcmask 752640
  %v144 = vsel %vm143, %v137, %v142
  %147 = vst [vmem:[#allocation2 + $0x90] sm:$0xff] %v144
  %148 = vst.msk [vmem:[#allocation2 + $0x98] sm:$0xf] %vm44, %v139
  %v149 = vld [vmem:[%s0] sm:$0xff]
  %v150 = vld [vmem:[%s0 + $0x8] sm:$0xf]
  %153 = vrot.lane.b32.xlu0 %v149, 91
  %v154 = vpop.permute.xlu0 %153
  %155 = vrot.lane.b32.xlu0 %v150, 91
  %v156 = vpop.permute.xlu0 %155
  %v157 = vrot.slane %v154, 4
  %v158 = vrot.slane %v156, 4
  %v159 = vsel %vm56, %v157, %v158
  %vm160 = vcmask 744448
  %v161 = vsel %vm160, %v154, %v159
  %164 = vst [vmem:[#allocation2 + $0xa8] sm:$0xff] %v161
  %165 = vst.msk [vmem:[#allocation2 + $0xb0] sm:$0xf] %vm44, %v156
  %v166 = vld [vmem:[%s0] sm:$0xff]
  %v167 = vld [vmem:[%s0 + $0x8] sm:$0xf]
  %170 = vrot.lane.b32.xlu0 %v166, 90
  %v171 = vpop.permute.xlu0 %170
  %172 = vrot.lane.b32.xlu0 %v167, 90
  %v173 = vpop.permute.xlu0 %172
  %v174 = vrot.slane %v171, 4
  %v175 = vrot.slane %v173, 4
  %v176 = vsel %vm56, %v174, %v175
  %vm177 = vcmask 736256
  %v178 = vsel %vm177, %v171, %v176
  %181 = vst [vmem:[#allocation2 + $0xc0] sm:$0xff] %v178
  %182 = vst.msk [vmem:[#allocation2 + $0xc8] sm:$0xf] %vm44, %v173
  %s183 = scalar_lea.vmem %s0, 12
  %v184 = vld [vmem:[%s183] sm:$0xff]
  %v185 = vld [vmem:[%s183 + $0x8] sm:$0xf]
  %186 = vst [vmem:[#allocation2 + $0xc] sm:$0xff] %v184
  %187 = vst.msk [vmem:[#allocation2 + $0x14] sm:$0xf] %vm44, %v185
  %v188 = vld [vmem:[%s183] sm:$0xff]
  %v189 = vld [vmem:[%s183 + $0x8] sm:$0xf]
  %192 = vrot.lane.b32.xlu0 %v188, 127
  %v193 = vpop.permute.xlu0 %192
  %194 = vrot.lane.b32.xlu0 %v189, 127
  %v195 = vpop.permute.xlu0 %194
  %v196 = vrot.slane %v193, 4
  %v197 = vrot.slane %v195, 4
  %v198 = vsel %vm56, %v196, %v197
  %v199 = vsel %vm58, %v193, %v198
  %202 = vst [vmem:[#allocation2 + $0x24] sm:$0xff] %v199
  %203 = vst.msk [vmem:[#allocation2 + $0x2c] sm:$0xf] %vm44, %v195
  %v204 = vld [vmem:[%s183] sm:$0xff]
  %v205 = vld [vmem:[%s183 + $0x8] sm:$0xf]
  %208 = vrot.lane.b32.xlu0 %v204, 126
  %v209 = vpop.permute.xlu0 %208
  %210 = vrot.lane.b32.xlu0 %v205, 126
  %v211 = vpop.permute.xlu0 %210
  %v212 = vrot.slane %v209, 4
  %v213 = vrot.slane %v211, 4
  %v214 = vsel %vm56, %v212, %v213
  %v215 = vsel %vm75, %v209, %v214
  %218 = vst [vmem:[#allocation2 + $0x3c] sm:$0xff] %v215
  %219 = vst.msk [vmem:[#allocation2 + $0x44] sm:$0xf] %vm44, %v211
  %v220 = vld [vmem:[%s183] sm:$0xff]
  %v221 = vld [vmem:[%s183 + $0x8] sm:$0xf]
  %224 = vrot.lane.b32.xlu0 %v220, 110
  %v225 = vpop.permute.xlu0 %224
  %226 = vrot.lane.b32.xlu0 %v221, 110
  %v227 = vpop.permute.xlu0 %226
  %v228 = vrot.slane %v225, 4
  %v229 = vrot.slane %v227, 4
  %v230 = vsel %vm56, %v228, %v229
  %v231 = vsel %vm92, %v225, %v230
  %234 = vst [vmem:[#allocation2 + $0x54] sm:$0xff] %v231
  %235 = vst.msk [vmem:[#allocation2 + $0x5c] sm:$0xf] %vm44, %v227
  %v236 = vld [vmem:[%s183] sm:$0xff]
  %v237 = vld [vmem:[%s183 + $0x8] sm:$0xf]
  %240 = vrot.lane.b32.xlu0 %v236, 109
  %v241 = vpop.permute.xlu0 %240
  %242 = vrot.lane.b32.xlu0 %v237, 109
  %v243 = vpop.permute.xlu0 %242
  %v244 = vrot.slane %v241, 4
  %v245 = vrot.slane %v243, 4
  %v246 = vsel %vm56, %v244, %v245
  %v247 = vsel %vm109, %v241, %v246
  %250 = vst [vmem:[#allocation2 + $0x6c] sm:$0xff] %v247
  %251 = vst.msk [vmem:[#allocation2 + $0x74] sm:$0xf] %vm44, %v243
  %v252 = vld [vmem:[%s183] sm:$0xff]
  %v253 = vld [vmem:[%s183 + $0x8] sm:$0xf]
  %256 = vrot.lane.b32.xlu0 %v252, 108
  %v257 = vpop.permute.xlu0 %256
  %258 = vrot.lane.b32.xlu0 %v253, 108
  %v259 = vpop.permute.xlu0 %258
  %v260 = vrot.slane %v257, 4
  %v261 = vrot.slane %v259, 4
  %v262 = vsel %vm56, %v260, %v261
  %v263 = vsel %vm126, %v257, %v262
  %266 = vst [vmem:[#allocation2 + $0x84] sm:$0xff] %v263
  %267 = vst.msk [vmem:[#allocation2 + $0x8c] sm:$0xf] %vm44, %v259
  %v268 = vld [vmem:[%s183] sm:$0xff]
  %v269 = vld [vmem:[%s183 + $0x8] sm:$0xf]
  %272 = vrot.lane.b32.xlu0 %v268, 92
  %v273 = vpop.permute.xlu0 %272
  %274 = vrot.lane.b32.xlu0 %v269, 92
  %v275 = vpop.permute.xlu0 %274
  %v276 = vrot.slane %v273, 4
  %v277 = vrot.slane %v275, 4
  %v278 = vsel %vm56, %v276, %v277
  %v279 = vsel %vm143, %v273, %v278
  %282 = vst [vmem:[#allocation2 + $0x9c] sm:$0xff] %v279
  %283 = vst.msk [vmem:[#allocation2 + $0xa4] sm:$0xf] %vm44, %v275
  %v284 = vld [vmem:[%s183] sm:$0xff]
  %v285 = vld [vmem:[%s183 + $0x8] sm:$0xf]
  %288 = vrot.lane.b32.xlu0 %v284, 91
  %v289 = vpop.permute.xlu0 %288
  %290 = vrot.lane.b32.xlu0 %v285, 91
  %v291 = vpop.permute.xlu0 %290
  %v292 = vrot.slane %v289, 4
  %v293 = vrot.slane %v291, 4
  %v294 = vsel %vm56, %v292, %v293
  %v295 = vsel %vm160, %v289, %v294
  %298 = vst [vmem:[#allocation2 + $0xb4] sm:$0xff] %v295
  %299 = vst.msk [vmem:[#allocation2 + $0xbc] sm:$0xf] %vm44, %v291
  %v300 = vld [vmem:[%s183] sm:$0xff]
  %v301 = vld [vmem:[%s183 + $0x8] sm:$0xf]
  %304 = vrot.lane.b32.xlu0 %v300, 90
  %v305 = vpop.permute.xlu0 %304
  %306 = vrot.lane.b32.xlu0 %v301, 90
  %v307 = vpop.permute.xlu0 %306
  %v308 = vrot.slane %v305, 4
  %v309 = vrot.slane %v307, 4
  %v310 = vsel %vm56, %v308, %v309
  %v311 = vsel %vm177, %v305, %v310
  %314 = vst [vmem:[#allocation2 + $0xcc] sm:$0xff] %v311
  %315 = vst.msk [vmem:[#allocation2 + $0xd4] sm:$0xf] %vm44, %v307
  %v316 = vld [vmem:[%s1] sm:$0xf]
  %v317 = vld [vmem:[#allocation2] sm:$0xff]
  %v318 = vld [vmem:[#allocation2 + $0x8] sm:$0xff]
  %v319 = vld [vmem:[#allocation2 + $0x10] sm:$0xff]
  %v320 = vld [vmem:[#allocation2 + $0x18] sm:$0xff]
  %v321 = vld [vmem:[#allocation2 + $0x20] sm:$0xff]
  %v322 = vld [vmem:[#allocation2 + $0x28] sm:$0xff]
  %v323 = vld [vmem:[#allocation2 + $0x30] sm:$0xff]
  %v324 = vld [vmem:[#allocation2 + $0x38] sm:$0xff]
  %v325 = vld [vmem:[#allocation2 + $0x40] sm:$0xff]
  %v326 = vld [vmem:[#allocation2 + $0x48] sm:$0xff]
  %v327 = vld [vmem:[#allocation2 + $0x50] sm:$0xff]
  %v328 = vld [vmem:[#allocation2 + $0x58] sm:$0xff]
  %v329 = vld [vmem:[#allocation2 + $0x60] sm:$0xff]
  %v330 = vld [vmem:[#allocation2 + $0x68] sm:$0xff]
  %v331 = vld [vmem:[#allocation2 + $0x70] sm:$0xff]
  %v332 = vld [vmem:[#allocation2 + $0x78] sm:$0xff]
  %v333 = vld [vmem:[#allocation2 + $0x80] sm:$0xff]
  %v334 = vld [vmem:[#allocation2 + $0x88] sm:$0xff]
  %v335 = vld [vmem:[#allocation2 + $0x90] sm:$0xff]
  %v336 = vld [vmem:[#allocation2 + $0x98] sm:$0xff]
  %v337 = vld [vmem:[#allocation2 + $0xa0] sm:$0xff]
  %v338 = vld [vmem:[#allocation2 + $0xa8] sm:$0xff]
  %v339 = vld [vmem:[#allocation2 + $0xb0] sm:$0xff]
  %v340 = vld [vmem:[#allocation2 + $0xb8] sm:$0xff]
  %v341 = vld [vmem:[#allocation2 + $0xc0] sm:$0xff]
  %v342 = vld [vmem:[#allocation2 + $0xc8] sm:$0xff]
  %v343 = vld [vmem:[#allocation2 + $0xd0] sm:$0xff]
  %v344 = vld [vmem:[#allocation2 + $0xd8] sm:$0x11]
  %v345 = vld [vmem:[#allocation2 + $0xe0] sm:$0x11]
  %v346 = vld [vmem:[#allocation2 + $0xe8] sm:$0x11]
  %v377 = vunpack.c.l.b16 %v317
  %v378 = vunpack.c.h.b16 %v317
  %v379 = vunpack.c.l.b16 %v318
  %v380 = vunpack.c.h.b16 %v318
  %v381 = vunpack.c.l.b16 %v319
  %v382 = vunpack.c.h.b16 %v319
  %v383 = vunpack.c.l.b16 %v320
  %v384 = vunpack.c.h.b16 %v320
  %v385 = vunpack.c.l.b16 %v321
  %v386 = vunpack.c.h.b16 %v321
  %v387 = vunpack.c.l.b16 %v322
  %v388 = vunpack.c.h.b16 %v322
  %v389 = vunpack.c.l.b16 %v323
  %v390 = vunpack.c.h.b16 %v323
  %v391 = vunpack.c.l.b16 %v324
  %v392 = vunpack.c.h.b16 %v324
  %v393 = vunpack.c.l.b16 %v325
  %v394 = vunpack.c.h.b16 %v325
  %v395 = vunpack.c.l.b16 %v326
  %v396 = vunpack.c.h.b16 %v326
  %v397 = vunpack.c.l.b16 %v327
  %v398 = vunpack.c.h.b16 %v327
  %v399 = vunpack.c.l.b16 %v328
  %v400 = vunpack.c.h.b16 %v328
  %v401 = vunpack.c.l.b16 %v329
  %v402 = vunpack.c.h.b16 %v329
  %v403 = vunpack.c.l.b16 %v330
  %v404 = vunpack.c.h.b16 %v330
  %v405 = vunpack.c.l.b16 %v331
  %v406 = vunpack.c.h.b16 %v331
  %v407 = vunpack.c.l.b16 %v332
  %v408 = vunpack.c.h.b16 %v332
  %v409 = vunpack.c.l.b16 %v333
  %v410 = vunpack.c.h.b16 %v333
  %v411 = vunpack.c.l.b16 %v334
  %v412 = vunpack.c.h.b16 %v334
  %v413 = vunpack.c.l.b16 %v335
  %v414 = vunpack.c.h.b16 %v335
  %v415 = vunpack.c.l.b16 %v336
  %v416 = vunpack.c.h.b16 %v336
  %v417 = vunpack.c.l.b16 %v337
  %v418 = vunpack.c.h.b16 %v337
  %v419 = vunpack.c.l.b16 %v338
  %v420 = vunpack.c.h.b16 %v338
  %v421 = vunpack.c.l.b16 %v339
  %v422 = vunpack.c.h.b16 %v339
  %v423 = vunpack.c.l.b16 %v340
  %v424 = vunpack.c.h.b16 %v340
  %v425 = vunpack.c.l.b16 %v341
  %v426 = vunpack.c.h.b16 %v341
  %v427 = vunpack.c.l.b16 %v342
  %v428 = vunpack.c.h.b16 %v342
  %v429 = vunpack.c.l.b16 %v343
  %v430 = vunpack.c.h.b16 %v343
  %v431 = vunpack.c.l.b16 %v344
  %v432 = vunpack.c.h.b16 %v344
  %v433 = vunpack.c.l.b16 %v345
  %v434 = vunpack.c.h.b16 %v345
  %v435 = vunpack.c.l.b16 %v346
  %v436 = vunpack.c.h.b16 %v346
  %v437 = vpack.c.b16 %v383, %v377
  %v438 = vpack.c.b16 %v384, %v378
  %v439 = vpack.c.b16 %v385, %v379
  %v440 = vpack.c.b16 %v386, %v380
  %v441 = vpack.c.b16 %v387, %v381
  %v442 = vpack.c.b16 %v388, %v382
  %v443 = vpack.c.b16 %v395, %v389
  %v444 = vpack.c.b16 %v396, %v390
  %v445 = vpack.c.b16 %v397, %v391
  %v446 = vpack.c.b16 %v398, %v392
  %v447 = vpack.c.b16 %v399, %v393
  %v448 = vpack.c.b16 %v400, %v394
  %v449 = vpack.c.b16 %v407, %v401
  %v450 = vpack.c.b16 %v408, %v402
  %v451 = vpack.c.b16 %v409, %v403
  %v452 = vpack.c.b16 %v410, %v404
  %v453 = vpack.c.b16 %v411, %v405
  %v454 = vpack.c.b16 %v412, %v406
  %v455 = vpack.c.b16 %v419, %v413
  %v456 = vpack.c.b16 %v420, %v414
  %v457 = vpack.c.b16 %v421, %v415
  %v458 = vpack.c.b16 %v422, %v416
  %v459 = vpack.c.b16 %v423, %v417
  %v460 = vpack.c.b16 %v424, %v418
  %v461 = vpack.c.b16 %v431, %v425
  %v462 = vpack.c.b16 %v432, %v426
  %v463 = vpack.c.b16 %v433, %v427
  %v464 = vpack.c.b16 %v434, %v428
  %v465 = vpack.c.b16 %v435, %v429
  %v466 = vpack.c.b16 %v436, %v430
  %vm491 = vcmask 596992
  %v493 = vsel %vm491, %v316, 0
  %vm495 = vcmask 1043456
  %vm496 = vcmask 1044480
  %v497 = vsel %vm495, 4294967295, 65535
  %v498 = vsel %vm496, %v497, 0
  %v500 = vand.u32 %v461, %v498
  %v503 = vand.u32 %v462, %v498
  %v506 = vand.u32 %v463, %v498
  %v509 = vand.u32 %v464, %v498
  %v512 = vand.u32 %v465, %v498
  %v515 = vand.u32 %v466, %v498
  %517 = vmatpush.bf16.msra.mxu0 0
  %518 = vmatpush.bf16.msra.mxu0 0
  %519 = vmatpush.bf16.msra.mxu0 0
  %520 = vmatpush.bf16.msra.mxu0 %v500
  %521 = vmatpush.bf16.msra.mxu0 %v455
  %522 = vmatpush.bf16.msra.mxu0 %v449
  %523 = vmatpush.bf16.msra.mxu0 %v443
  %524 = vmatpush.bf16.msra.mxu0 %v437
  %525 = vmatmul.bf16.gmra.mxu0 %v493
  %v526 = vpop.f32.mrf.mxu0
  %v527 = vadd.f32 0.0, %v526
  %v528 = vpop.f32.mrf.mxu0
  %529 = vdwg.mxu0
  %530 = vmatpush.bf16.msra.mxu0 0
  %531 = vmatpush.bf16.msra.mxu0 0
  %532 = vmatpush.bf16.msra.mxu0 0
  %533 = vmatpush.bf16.msra.mxu0 %v503
  %534 = vmatpush.bf16.msra.mxu0 %v456
  %535 = vmatpush.bf16.msra.mxu0 %v450
  %536 = vmatpush.bf16.msra.mxu0 %v444
  %537 = vmatpush.bf16.msra.mxu0 %v438
  %538 = vmatmul.bf16.gmra.mxu0 %v493
  %v539 = vpop.f32.mrf.mxu0
  %v540 = vadd.f32 0.0, %v539
  %v541 = vpop.f32.mrf.mxu0
  %542 = vdwg.mxu0
  %543 = vmatpush.bf16.msra.mxu0 0
  %544 = vmatpush.bf16.msra.mxu0 0
  %545 = vmatpush.bf16.msra.mxu0 0
  %546 = vmatpush.bf16.msra.mxu0 %v506
  %547 = vmatpush.bf16.msra.mxu0 %v457
  %548 = vmatpush.bf16.msra.mxu0 %v451
  %549 = vmatpush.bf16.msra.mxu0 %v445
  %550 = vmatpush.bf16.msra.mxu0 %v439
  %551 = vmatmul.bf16.gmra.mxu0 %v493
  %v552 = vpop.f32.mrf.mxu0
  %v553 = vadd.f32 0.0, %v552
  %v554 = vpop.f32.mrf.mxu0
  %555 = vdwg.mxu0
  %556 = vmatpush.bf16.msra.mxu0 0
  %557 = vmatpush.bf16.msra.mxu0 0
  %558 = vmatpush.bf16.msra.mxu0 0
  %559 = vmatpush.bf16.msra.mxu0 %v509
  %560 = vmatpush.bf16.msra.mxu0 %v458
  %561 = vmatpush.bf16.msra.mxu0 %v452
  %562 = vmatpush.bf16.msra.mxu0 %v446
  %563 = vmatpush.bf16.msra.mxu0 %v440
  %564 = vmatmul.bf16.gmra.mxu0 %v493
  %v565 = vpop.f32.mrf.mxu0
  %v566 = vadd.f32 0.0, %v565
  %v567 = vpop.f32.mrf.mxu0
  %568 = vdwg.mxu0
  %569 = vmatpush.bf16.msra.mxu0 0
  %570 = vmatpush.bf16.msra.mxu0 0
  %571 = vmatpush.bf16.msra.mxu0 0
  %572 = vmatpush.bf16.msra.mxu0 %v512
  %573 = vmatpush.bf16.msra.mxu0 %v459
  %574 = vmatpush.bf16.msra.mxu0 %v453
  %575 = vmatpush.bf16.msra.mxu0 %v447
  %576 = vmatpush.bf16.msra.mxu0 %v441
  %577 = vmatmul.bf16.gmra.mxu0 %v493
  %v578 = vpop.f32.mrf.mxu0
  %v579 = vadd.f32 0.0, %v578
  %v580 = vpop.f32.mrf.mxu0
  %581 = vdwg.mxu0
  %582 = vmatpush.bf16.msra.mxu0 0
  %583 = vmatpush.bf16.msra.mxu0 0
  %584 = vmatpush.bf16.msra.mxu0 0
  %585 = vmatpush.bf16.msra.mxu0 %v515
  %586 = vmatpush.bf16.msra.mxu0 %v460
  %587 = vmatpush.bf16.msra.mxu0 %v454
  %588 = vmatpush.bf16.msra.mxu0 %v448
  %589 = vmatpush.bf16.msra.mxu0 %v442
  %590 = vmatmul.bf16.gmra.mxu0 %v493
  %v591 = vpop.f32.mrf.mxu0
  %v592 = vadd.f32 0.0, %v591
  %v593 = vpop.f32.mrf.mxu0
  %594 = vdwg.mxu0
  %v595 = vmax.f32 %v527, 0.0
  %v596 = vmax.f32 %v540, 0.0
  %v597 = vmax.f32 %v553, 0.0
  %v598 = vmax.f32 %v566, 0.0
  %v599 = vmax.f32 %v579, 0.0
  %v600 = vmax.f32 %v592, 0.0
  %v601 = vpack.c.bf16 %v596, %v595
  %v602 = vpack.c.bf16 %v598, %v597
  %v603 = vpack.c.bf16 %v600, %v599
  %604 = vst [vmem:[#allocation3] sm:$0xff] %v601
  %605 = vst [vmem:[#allocation3 + $0x8] sm:$0xff] %v602
  %606 = vst [vmem:[#allocation3 + $0x10] sm:$0xff] %v603
  %v607 = vld [vmem:[%s2] sm:$0x3]
  %v608 = vld [vmem:[#allocation3] sm:$0xff]
  %v609 = vld [vmem:[#allocation3 + $0x8] sm:$0xff]
  %v610 = vld [vmem:[#allocation3 + $0x10] sm:$0xff]
  %v611 = vld [vmem:[#allocation3 + $0x18] sm:$0x11]
  %v612 = vld [vmem:[#allocation3 + $0x20] sm:$0x11]
  %v613 = vld [vmem:[#allocation3 + $0x28] sm:$0x11]
  %v620 = vunpack.c.l.b16 %v608
  %v621 = vunpack.c.h.b16 %v608
  %v622 = vunpack.c.l.b16 %v609
  %v623 = vunpack.c.h.b16 %v609
  %v624 = vunpack.c.l.b16 %v610
  %v625 = vunpack.c.h.b16 %v610
  %v626 = vunpack.c.l.b16 %v611
  %v627 = vunpack.c.h.b16 %v611
  %v628 = vunpack.c.l.b16 %v612
  %v629 = vunpack.c.h.b16 %v612
  %v630 = vunpack.c.l.b16 %v613
  %v631 = vunpack.c.h.b16 %v613
  %v632 = vpack.c.b16 %v626, %v620
  %v633 = vpack.c.b16 %v627, %v621
  %v634 = vpack.c.b16 %v628, %v622
  %v635 = vpack.c.b16 %v629, %v623
  %v636 = vpack.c.b16 %v630, %v624
  %v637 = vpack.c.b16 %v631, %v625
  %vm638 = vcmask 72704
  %v640 = vsel %vm638, %v607, 0
  %v643 = vand.u32 %v632, %v498
  %v646 = vand.u32 %v633, %v498
  %v649 = vand.u32 %v634, %v498
  %v652 = vand.u32 %v635, %v498
  %v655 = vand.u32 %v636, %v498
  %v658 = vand.u32 %v637, %v498
  %660 = vmatpush.bf16.msra.mxu0 0
  %661 = vmatpush.bf16.msra.mxu0 0
  %662 = vmatpush.bf16.msra.mxu0 0
  %663 = vmatpush.bf16.msra.mxu0 0
  %664 = vmatpush.bf16.msra.mxu0 0
  %665 = vmatpush.bf16.msra.mxu0 0
  %666 = vmatpush.bf16.msra.mxu0 0
  %667 = vmatpush.bf16.msra.mxu0 %v643
  %668 = vmatmul.bf16.gmra.mxu0 %v640
  %v669 = vpop.f32.mrf.mxu0
  %v670 = vadd.f32 0.0, %v669
  %v671 = vpop.f32.mrf.mxu0
  %672 = vdwg.mxu0
  %673 = vmatpush.bf16.msra.mxu0 0
  %674 = vmatpush.bf16.msra.mxu0 0
  %675 = vmatpush.bf16.msra.mxu0 0
  %676 = vmatpush.bf16.msra.mxu0 0
  %677 = vmatpush.bf16.msra.mxu0 0
  %678 = vmatpush.bf16.msra.mxu0 0
  %679 = vmatpush.bf16.msra.mxu0 0
  %680 = vmatpush.bf16.msra.mxu0 %v646
  %681 = vmatmul.bf16.gmra.mxu0 %v640
  %v682 = vpop.f32.mrf.mxu0
  %v683 = vadd.f32 0.0, %v682
  %v684 = vpop.f32.mrf.mxu0
  %685 = vdwg.mxu0
  %686 = vmatpush.bf16.msra.mxu0 0
  %687 = vmatpush.bf16.msra.mxu0 0
  %688 = vmatpush.bf16.msra.mxu0 0
  %689 = vmatpush.bf16.msra.mxu0 0
  %690 = vmatpush.bf16.msra.mxu0 0
  %691 = vmatpush.bf16.msra.mxu0 0
  %692 = vmatpush.bf16.msra.mxu0 0
  %693 = vmatpush.bf16.msra.mxu0 %v649
  %694 = vmatmul.bf16.gmra.mxu0 %v640
  %v695 = vpop.f32.mrf.mxu0
  %v696 = vadd.f32 0.0, %v695
  %v697 = vpop.f32.mrf.mxu0
  %698 = vdwg.mxu0
  %699 = vmatpush.bf16.msra.mxu0 0
  %700 = vmatpush.bf16.msra.mxu0 0
  %701 = vmatpush.bf16.msra.mxu0 0
  %702 = vmatpush.bf16.msra.mxu0 0
  %703 = vmatpush.bf16.msra.mxu0 0
  %704 = vmatpush.bf16.msra.mxu0 0
  %705 = vmatpush.bf16.msra.mxu0 0
  %706 = vmatpush.bf16.msra.mxu0 %v652
  %707 = vmatmul.bf16.gmra.mxu0 %v640
  %v708 = vpop.f32.mrf.mxu0
  %v709 = vadd.f32 0.0, %v708
  %v710 = vpop.f32.mrf.mxu0
  %711 = vdwg.mxu0
  %712 = vmatpush.bf16.msra.mxu0 0
  %713 = vmatpush.bf16.msra.mxu0 0
  %714 = vmatpush.bf16.msra.mxu0 0
  %715 = vmatpush.bf16.msra.mxu0 0
  %716 = vmatpush.bf16.msra.mxu0 0
  %717 = vmatpush.bf16.msra.mxu0 0
  %718 = vmatpush.bf16.msra.mxu0 0
  %719 = vmatpush.bf16.msra.mxu0 %v655
  %720 = vmatmul.bf16.gmra.mxu0 %v640
  %v721 = vpop.f32.mrf.mxu0
  %v722 = vadd.f32 0.0, %v721
  %v723 = vpop.f32.mrf.mxu0
  %724 = vdwg.mxu0
  %725 = vmatpush.bf16.msra.mxu0 0
  %726 = vmatpush.bf16.msra.mxu0 0
  %727 = vmatpush.bf16.msra.mxu0 0
  %728 = vmatpush.bf16.msra.mxu0 0
  %729 = vmatpush.bf16.msra.mxu0 0
  %730 = vmatpush.bf16.msra.mxu0 0
  %731 = vmatpush.bf16.msra.mxu0 0
  %732 = vmatpush.bf16.msra.mxu0 %v658
  %733 = vmatmul.bf16.gmra.mxu0 %v640
  %v734 = vpop.f32.mrf.mxu0
  %v735 = vadd.f32 0.0, %v734
  %v736 = vpop.f32.mrf.mxu0
  %737 = vdwg.mxu0
  %v738 = vmax.f32 %v670, 0.0
  %v739 = vmax.f32 %v683, 0.0
  %v740 = vmax.f32 %v696, 0.0
  %v741 = vmax.f32 %v709, 0.0
  %v742 = vmax.f32 %v722, 0.0
  %v743 = vmax.f32 %v735, 0.0
  %v744 = vpack.c.bf16 %v739, %v738
  %v745 = vpack.c.bf16 %v741, %v740
  %v746 = vpack.c.bf16 %v743, %v742
  %vm747 = vcmask 123904
  %748 = vst.msk [vmem:[%s3] sm:$0x3] %vm747, %v744
  %v750 = vrot.slane %v744, 2
  %vm751 = vcmask 1041408
  %v754 = vsel %vm751, %v744, %v750
  %756 = vrot.lane.b32.xlu0 %v754, 126
  %v757 = vpop.permute.xlu0 %756
  %vm759 = vcmask 255104
  %760 = vst.msk [vmem:[%s3] sm:$0x3] %vm759, %v757
  %761 = vrot.lane.b32.xlu0 %v754, 124
  %v762 = vpop.permute.xlu0 %761
  %vm764 = vcmask 386304
  %765 = vst.msk [vmem:[%s3] sm:$0x3] %vm764, %v762
  %766 = vrot.lane.b32.xlu0 %v754, 122
  %v767 = vpop.permute.xlu0 %766
  %vm769 = vcmask 517504
  %770 = vst.msk [vmem:[%s3] sm:$0x3] %vm769, %v767
  %771 = vrot.lane.b32.xlu0 %v754, 120
  %v772 = vpop.permute.xlu0 %771
  %vm774 = vcmask 648704
  %775 = vst.msk [vmem:[%s3] sm:$0x3] %vm774, %v772
  %776 = vrot.lane.b32.xlu0 %v754, 118
  %v777 = vpop.permute.xlu0 %776
  %vm779 = vcmask 779904
  %780 = vst.msk [vmem:[%s3] sm:$0x3] %vm779, %v777
  %781 = vrot.lane.b32.xlu0 %v754, 116
  %v782 = vpop.permute.xlu0 %781
  %vm784 = vcmask 911104
  %785 = vst.msk [vmem:[%s3] sm:$0x3] %vm784, %v782
  %786 = vrot.lane.b32.xlu0 %v754, 114
  %v787 = vpop.permute.xlu0 %786
  %v788 = vrot.slane %v787, 2
  %vm789 = vcmask 932864
  %v790 = vsel %vm789, %v787, %v788
  %vm792 = vcmask 1042304
  %793 = vst.msk [vmem:[%s3] sm:$0x3] %vm792, %v790
  %794 = vrot.lane.b32.xlu0 %v744, 112
  %v795 = vpop.permute.xlu0 %794
  %v796 = vrot.slane %v795, 4
  %798 = vst.msk [vmem:[%s3 + $0x2] sm:$0x3] %vm747, %v796
  %799 = vrot.lane.b32.xlu0 %v744, 94
  %v800 = vpop.permute.xlu0 %799
  %v801 = vrot.slane %v800, 4
  %v802 = vrot.slane %v801, 2
  %v805 = vsel %vm751, %v801, %v802
  %807 = vrot.lane.b32.xlu0 %v805, 16
  %v808 = vpop.permute.xlu0 %807
  %810 = vst.msk [vmem:[%s3 + $0x2] sm:$0x3] %vm759, %v808
  %811 = vrot.lane.b32.xlu0 %v744, 76
  %v812 = vpop.permute.xlu0 %811
  %v813 = vrot.slane %v812, 4
  %v814 = vrot.slane %v813, 2
  %v817 = vsel %vm751, %v813, %v814
  %819 = vrot.lane.b32.xlu0 %v817, 32
  %v820 = vpop.permute.xlu0 %819
  %822 = vst.msk [vmem:[%s3 + $0x2] sm:$0x3] %vm764, %v820
  %823 = vrot.lane.b32.xlu0 %v744, 58
  %v824 = vpop.permute.xlu0 %823
  %v825 = vrot.slane %v824, 4
  %v826 = vrot.slane %v825, 2
  %v829 = vsel %vm751, %v825, %v826
  %831 = vrot.lane.b32.xlu0 %v829, 48
  %v832 = vpop.permute.xlu0 %831
  %834 = vst.msk [vmem:[%s3 + $0x2] sm:$0x3] %vm769, %v832
  %835 = vrot.lane.b32.xlu0 %v744, 40
  %v836 = vpop.permute.xlu0 %835
  %v837 = vrot.slane %v836, 4
  %v838 = vrot.slane %v837, 2
  %v841 = vsel %vm751, %v837, %v838
  %843 = vrot.lane.b32.xlu0 %v841, 64
  %v844 = vpop.permute.xlu0 %843
  %846 = vst.msk [vmem:[%s3 + $0x2] sm:$0x3] %vm774, %v844
  %847 = vrot.lane.b32.xlu0 %v744, 22
  %v848 = vpop.permute.xlu0 %847
  %v849 = vrot.slane %v848, 4
  %v850 = vrot.slane %v849, 2
  %v853 = vsel %vm751, %v849, %v850
  %855 = vrot.lane.b32.xlu0 %v853, 80
  %v856 = vpop.permute.xlu0 %855
  %858 = vst.msk [vmem:[%s3 + $0x2] sm:$0x3] %vm779, %v856
  %860 = vrot.lane.b32.xlu0 %v744, 4
  %v861 = vpop.permute.xlu0 %860
  %862 = vrot.lane.b32.xlu0 %v745, 4
  %v863 = vpop.permute.xlu0 %862
  %v864 = vrot.slane %v861, 4
  %vm865 = vcmask 31744
  %v866 = vsel %vm865, %v864, %v863
  %v867 = vrot.slane %v866, 2
  %v870 = vsel %vm751, %v866, %v867
  %872 = vrot.lane.b32.xlu0 %v870, 96
  %v873 = vpop.permute.xlu0 %872
  %875 = vst.msk [vmem:[%s3 + $0x2] sm:$0x3] %vm784, %v873
  %v876 = vrot.slane %v745, 2
  %v879 = vsel %vm751, %v745, %v876
  %881 = vrot.lane.b32.xlu0 %v879, 98
  %v882 = vpop.permute.xlu0 %881
  %884 = vst.msk [vmem:[%s3 + $0x2] sm:$0x3] %vm792, %v882
  %v885 = vrot.slane %v745, 4
  %s887 = scalar_lea.vmem %s3, 4
  %888 = vst.msk [vmem:[%s887] sm:$0x3] %vm747, %v885
  %889 = vrot.lane.b32.xlu0 %v745, 110
  %v890 = vpop.permute.xlu0 %889
  %v891 = vrot.slane %v890, 4
  %v892 = vrot.slane %v891, 2
  %v895 = vsel %vm751, %v891, %v892
  %897 = vrot.lane.b32.xlu0 %v895, 16
  %v898 = vpop.permute.xlu0 %897
  %900 = vst.msk [vmem:[%s887] sm:$0x3] %vm759, %v898
  %901 = vrot.lane.b32.xlu0 %v745, 92
  %v902 = vpop.permute.xlu0 %901
  %v903 = vrot.slane %v902, 4
  %v904 = vrot.slane %v903, 2
  %v907 = vsel %vm751, %v903, %v904
  %909 = vrot.lane.b32.xlu0 %v907, 32
  %v910 = vpop.permute.xlu0 %909
  %912 = vst.msk [vmem:[%s887] sm:$0x3] %vm764, %v910
  %913 = vrot.lane.b32.xlu0 %v745, 74
  %v914 = vpop.permute.xlu0 %913
  %v915 = vrot.slane %v914, 4
  %v916 = vrot.slane %v915, 2
  %v919 = vsel %vm751, %v915, %v916
  %921 = vrot.lane.b32.xlu0 %v919, 48
  %v922 = vpop.permute.xlu0 %921
  %924 = vst.msk [vmem:[%s887] sm:$0x3] %vm769, %v922
  %925 = vrot.lane.b32.xlu0 %v745, 56
  %v926 = vpop.permute.xlu0 %925
  %v927 = vrot.slane %v926, 4
  %v928 = vrot.slane %v927, 2
  %v931 = vsel %vm751, %v927, %v928
  %933 = vrot.lane.b32.xlu0 %v931, 64
  %v934 = vpop.permute.xlu0 %933
  %936 = vst.msk [vmem:[%s887] sm:$0x3] %vm774, %v934
  %937 = vrot.lane.b32.xlu0 %v745, 38
  %v938 = vpop.permute.xlu0 %937
  %v939 = vrot.slane %v938, 4
  %v940 = vrot.slane %v939, 2
  %v943 = vsel %vm751, %v939, %v940
  %945 = vrot.lane.b32.xlu0 %v943, 80
  %v946 = vpop.permute.xlu0 %945
  %948 = vst.msk [vmem:[%s887] sm:$0x3] %vm779, %v946
  %949 = vrot.lane.b32.xlu0 %v745, 20
  %v950 = vpop.permute.xlu0 %949
  %v951 = vrot.slane %v950, 4
  %v952 = vrot.slane %v951, 2
  %v955 = vsel %vm751, %v951, %v952
  %957 = vrot.lane.b32.xlu0 %v955, 96
  %v958 = vpop.permute.xlu0 %957
  %960 = vst.msk [vmem:[%s887] sm:$0x3] %vm784, %v958
  %962 = vrot.lane.b32.xlu0 %v745, 2
  %v963 = vpop.permute.xlu0 %962
  %964 = vrot.lane.b32.xlu0 %v746, 2
  %v965 = vpop.permute.xlu0 %964
  %v966 = vrot.slane %v963, 4
  %vm967 = vcmask 15360
  %v968 = vsel %vm967, %v966, %v965
  %v969 = vrot.slane %v968, 2
  %v972 = vsel %vm751, %v968, %v969
  %974 = vrot.lane.b32.xlu0 %v972, 112
  %v975 = vpop.permute.xlu0 %974
  %977 = vst.msk [vmem:[%s887] sm:$0x3] %vm792, %v975
  %v978 = vrot.slane %v746, 2
  %v981 = vsel %vm751, %v746, %v978
  %983 = vrot.lane.b32.xlu0 %v981, 112
  %v984 = vpop.permute.xlu0 %983
  %986 = vst.msk [vmem:[%s887 + $0x2] sm:$0x3] %vm747, %v984
  %987 = vrot.lane.b32.xlu0 %v981, 110
  %v988 = vpop.permute.xlu0 %987
  %990 = vst.msk [vmem:[%s887 + $0x2] sm:$0x3] %vm759, %v988
  %991 = vrot.lane.b32.xlu0 %v981, 108
  %v992 = vpop.permute.xlu0 %991
  %994 = vst.msk [vmem:[%s887 + $0x2] sm:$0x3] %vm764, %v992
  %995 = vrot.lane.b32.xlu0 %v981, 106
  %v996 = vpop.permute.xlu0 %995
  %998 = vst.msk [vmem:[%s887 + $0x2] sm:$0x3] %vm769, %v996
  %999 = vrot.lane.b32.xlu0 %v981, 104
  %v1000 = vpop.permute.xlu0 %999
  %1002 = vst.msk [vmem:[%s887 + $0x2] sm:$0x3] %vm774, %v1000
  %1003 = vrot.lane.b32.xlu0 %v981, 102
  %v1004 = vpop.permute.xlu0 %1003
  %1006 = vst.msk [vmem:[%s887 + $0x2] sm:$0x3] %vm779, %v1004
  %1007 = vrot.lane.b32.xlu0 %v981, 100
  %v1008 = vpop.permute.xlu0 %1007
  %v1009 = vrot.slane %v1008, 2
  %vm1010 = vcmask 818176
  %v1011 = vsel %vm1010, %v1008, %v1009
  %1013 = vst.msk [vmem:[%s887 + $0x2] sm:$0x3] %vm784, %v1011
  %1014 = vrot.lane.b32.xlu0 %v746, 114
  %v1015 = vpop.permute.xlu0 %1014
  %v1016 = vrot.slane %v1015, 4
  %v1017 = vrot.slane %v1016, 2
  %v1020 = vsel %vm751, %v1016, %v1017
  %1022 = vrot.lane.b32.xlu0 %v1020, 112
  %v1023 = vpop.permute.xlu0 %1022
  %1025 = vst.msk [vmem:[%s887 + $0x2] sm:$0x3] %vm792, %v1023
  // Predicated region
  $region14: #{unet_up_block.1} parent=0 // pred_check
    _
  $region15: #{unet_up_block.1} parent=0 // pred_check_branch
    %1027 = sbr.rel (0) target = $region17
  $region16: #{unet_up_block.1} parent=0 // pred_region
    _
  $region17: #{unet_up_block.1} parent=0 // pred_fallthru
    _
  // Predicated region
  $region18: #{unet_up_block.1} parent=0 // pred_check
    _
  $region19: #{unet_up_block.1} parent=0 // pred_check_branch
    %1029 = sbr.rel (0) target = $region21
  $region20: #{unet_up_block.1} parent=0 // pred_region
    _
  $region21: #{unet_up_block.1} parent=0 // pred_fallthru
    _

</llo_original>
